<compile_context>
chip_gen: v7x
topology: tpu7x:2x2x1
jax: 0.10.0
libtpu: 0.0.40
codegen_flags: <defaults>
</compile_context>

<pallas_src>
import jax
import jax.numpy as jnp
import numpy as np
from jax.experimental import pallas as pl
from jax.experimental.pallas import tpu as pltpu


N_MID = 8                # fused(l2|l12), fused(l3|l13), l4..l9  (all ReLU)
N_SLOTS = N_MID + 1      # + fused final projection (l10|l14), no ReLU
_MAX_TILE_B = 512
_BUFFERED_1_OK = True    # flipped off if this build rejects pl.Buffered(1)


# ----------------------------------------------------------------------------
# Kernel: whole network on one [tile_b, *] activation tile (10 MXU passes).
# ----------------------------------------------------------------------------
def _qnet_kernel(xu_ref, w0_ref, w_ref, out_ref):
    cdt = w_ref.dtype
    # layer 0: fused linear1|linear11; the bias row of w0 also creates the
    # ones column (col P-1) used to fold the biases of every later layer.
    h = jnp.dot(xu_ref[...], w0_ref[...], preferred_element_type=jnp.float32)
    h = jnp.maximum(h, 0.0).astype(cdt)
    # 8 fused middle layers (ReLU); the finished Q2 activation rides along in
    # columns [n1:2n1] via identity blocks baked into the packed weights.
    for l in range(N_MID):
        h = jnp.dot(h, w_ref[l], preferred_element_type=jnp.float32)
        h = jnp.maximum(h, 0.0).astype(cdt)
    # fused final projection: linear10 -> col 0, linear14 -> col 1 (no ReLU)
    out = jnp.dot(h, w_ref[N_MID], preferred_element_type=jnp.float32)
    out_ref[...] = out.astype(out_ref.dtype)


# ----------------------------------------------------------------------------
# Compute dtype selection (bf16 on bf16-native generations, f32 otherwise).
# ----------------------------------------------------------------------------
def default_compute_dtype():
    try:
        kind = jax.devices()[0].device_kind.lower()
    except Exception:
        return jnp.float32
    if "v6" in kind or "v7" in kind:
        return jnp.bfloat16
    return jnp.float32


# ----------------------------------------------------------------------------
# One-time parameter packing: 14 Linear layers -> 10 block-diagonal,
# bias-folded matmuls.  params: list of 14 (W, b), W in PyTorch [out, in].
# ----------------------------------------------------------------------------
def pack_qnetwork_params(params, num_inputs, num_actions, hidden_dim, dtype=None):
    if dtype is None:
        dtype = default_compute_dtype()
    n1 = hidden_dim
    n2 = n1 // 2
    n3 = n2 // 2
    d_in = num_inputs + num_actions

    P = int(pl.cdiv(max(d_in, 2 * n1) + 1, 128) * 128)   # +1: ones/bias column
    ONE = P - 1
    K0 = int(pl.cdiv(d_in + 1, 8) * 8)                   # narrow input width

    w0 = np.zeros((K0, P), np.float32)
    wm = np.zeros((N_SLOTS, P, P), np.float32)

    def as_np(idx):
        w, b = params[idx]
        return np.asarray(w, np.float32), np.asarray(b, np.float32)

    def put0(layer_idx, col_off):
        w, b = as_np(layer_idx)                          # [out, in]
        n_out, n_in = w.shape
        w0[:n_in, col_off:col_off + n_out] = w.T
        w0[d_in, col_off:col_off + n_out] = b            # bias row hits the appended 1

    def put_mid(slot, layer_idx, row_off, col_off):
        w, b = as_np(layer_idx)
        n_out, n_in = w.shape
        wm[slot, row_off:row_off + n_in, col_off:col_off + n_out] = w.T
        wm[slot, ONE, col_off:col_off + n_out] = b       # bias via the ones column

    # layer 0: fused linear1 (cols 0:n1) | linear11 (cols n1:2n1)
    put0(0, 0)
    put0(10, n1)
    w0[d_in, ONE] = 1.0                                  # create the ones column

    # slot 0: fused linear2 (rows 0:n1 -> cols 0:n2) | linear12 (rows n1:2n1 -> cols n1:n1+n3)
    put_mid(0, 1, 0, 0)
    put_mid(0, 11, n1, n1)
    wm[0, ONE, ONE] = 1.0
    # slot 1: fused linear3 (rows 0:n2 -> cols 0:n3) | linear13 (rows n1:n1+n3 -> cols n1:2n1)
    put_mid(1, 2, 0, 0)
    put_mid(1, 12, n1, n1)
    wm[1, ONE, ONE] = 1.0
    # slots 2..7: linear4..linear9 on cols [0:*]; identity block carries the
    # finished Q2 activation (cols n1:2n1, already >= 0 so ReLU is a no-op).
    carry = n1 + np.arange(n1)
    for i in range(6):
        put_mid(2 + i, 3 + i, 0, 0)
        wm[2 + i, carry, carry] = 1.0
        wm[2 + i, ONE, ONE] = 1.0
    # slot 8: fused final projection linear10 -> col 0, linear14 -> col 1
    put_mid(8, 9, 0, 0)
    put_mid(8, 13, n1, 1)

    return {"w0": jnp.asarray(w0, dtype), "w_mid": jnp.asarray(wm, dtype)}


# ----------------------------------------------------------------------------
# Batch tiling: big tiles to amortize per-step overhead, but >= 2 grid steps
# once B >= 16 so the "parallel" axis can use both TensorCores on v7x.
# ----------------------------------------------------------------------------
def _batch_tiling(B):
    b8 = int(pl.cdiv(B, 8) * 8)
    if b8 < 16:
        tile_b = b8
    else:
        tile_b = min(_MAX_TILE_B, int(pl.cdiv(pl.cdiv(b8, 2), 8) * 8))
    b_pad = int(pl.cdiv(b8, tile_b) * tile_b)
    return tile_b, b_pad


# ----------------------------------------------------------------------------
# Forward wrapper
# ----------------------------------------------------------------------------
def deeper_qnetwork_forward(state, action, packed):
    """Returns (q1, q2), each [B, 1] float32."""
    global _BUFFERED_1_OK
    w0, wm = packed["w0"], packed["w_mid"]
    dtype = wm.dtype
    K0, P = w0.shape
    B = state.shape[0]
    d_in = state.shape[1] + action.shape[1]

    tile_b, b_pad = _batch_tiling(B)

    # Narrow kernel input [b_pad, K0]: features, an appended 1 (bias carrier),
    # zero pad columns to K0, zero pad rows to b_pad.  Never a [B, P] slab.
    cols = [state.astype(dtype), action.astype(dtype), jnp.ones((B, 1), dtype)]
    if K0 > d_in + 1:
        cols.append(jnp.zeros((B, K0 - d_in - 1), dtype))
    xu = jnp.concatenate(cols, axis=1)
    if b_pad != B:
        xu = jnp.pad(xu, ((0, b_pad - B), (0, 0)))       # padded rows stay all-zero

    grid = (b_pad // tile_b,)
    itemsize = jnp.dtype(dtype).itemsize
    cost = pl.CostEstimate(
        flops=int(2 * b_pad * P * (K0 + N_SLOTS * P)),
        transcendentals=0,
        bytes_accessed=int(xu.size * itemsize + w0.size * itemsize
                           + wm.size * itemsize + b_pad * P * 4),
    )

    def run(single_buffer_weights):
        # Weights never change across the batch grid: fetched once; optionally
        # single-buffered so the resident slab isn't duplicated in VMEM.
        w_kw = ({"pipeline_mode": pl.Buffered(1)} if single_buffer_weights else {})
        return pl.pallas_call(
            _qnet_kernel,
            out_shape=jax.ShapeDtypeStruct((b_pad, P), jnp.float32),
            grid=grid,
            in_specs=[
                pl.BlockSpec((tile_b, K0), lambda i: (i, 0)),
                pl.BlockSpec((K0, P), lambda i: (0, 0), **w_kw),
                pl.BlockSpec((N_SLOTS, P, P), lambda i: (0, 0, 0), **w_kw),
            ],
            out_specs=pl.BlockSpec((tile_b, P), lambda i: (i, 0)),
            compiler_params=pltpu.CompilerParams(
                dimension_semantics=("parallel",),
            ),
            cost_estimate=cost,
        )(xu, w0, wm)

    if _BUFFERED_1_OK:
        try:
            out = run(True)
        except Exception:
            _BUFFERED_1_OK = False          # fall back to default double-buffering
            out = run(False)
    else:
        out = run(False)

    return out[:B, 0:1], out[:B, 1:2]


# ----------------------------------------------------------------------------
# Parameter init matching nn.Linear shapes + weights_init_ (xavier, bias=0)
# ----------------------------------------------------------------------------
def make_params(key, num_inputs, num_actions, hidden_dim, zero_bias=True):
    n1 = hidden_dim
    n2 = n1 // 2
    n3 = n2 // 2
    n4 = n3 // 2
    n5 = n4 // 2
    d_in = num_inputs + num_actions
    layer_dims = [
        (d_in, n1), (n1, n2), (n2, n3), (n3, n4), (n4, n5),
        (n5, n4), (n4, n3), (n3, n2), (n2, n1), (n1, 1),
        (d_in, n1), (n1, n3), (n3, n1), (n1, 1),
    ]
    params = []
    keys = jax.random.split(key, 2 * len(layer_dims))
    for idx, (fan_in, fan_out) in enumerate(layer_dims):
        kw, kb = keys[2 * idx], keys[2 * idx + 1]
        bound = (6.0 / (fan_in + fan_out)) ** 0.5        # xavier_uniform_, gain=1
        w = jax.random.uniform(kw, (fan_out, fan_in), jnp.float32, -bound, bound)
        if zero_bias:
            b = jnp.zeros((fan_out,), jnp.float32)       # constant_(bias, 0)
        else:
            b = jax.random.uniform(kb, (fan_out,), jnp.float32, -0.1, 0.1)
        params.append((w, b))
    return params


# Pure-JAX reference (correctness check)
def _reference_forward(state, action, params):
    xu = jnp.concatenate([state, action], axis=1).astype(jnp.float32)

    def dense(x, wb, relu):
        w, b = wb
        y = x @ w.T + b
        return jnp.maximum(y, 0.0) if relu else y

    x1 = xu
    for i in range(9):
        x1 = dense(x1, params[i], True)
    x1 = dense(x1, params[9], False)

    x2 = xu
    for i in range(10, 13):
        x2 = dense(x2, params[i], True)
    x2 = dense(x2, params[13], False)
    return x1, x2


if __name__ == "__main__":
    key = jax.random.PRNGKey(0)
    k_state, k_action, k_p1, k_p2 = jax.random.split(key, 4)

    batch, num_inputs, num_actions, hidden_dim = 4, 12, 4, 32

    state = jax.random.normal(k_state, (batch, num_inputs), jnp.float32)
    action = jax.random.normal(k_action, (batch, num_actions), jnp.float32)

    # --- f32 path, spec-compliant zero biases, single grid step -------------
    params = make_params(k_p1, num_inputs, num_actions, hidden_dim)
    packed = pack_qnetwork_params(params, num_inputs, num_actions, hidden_dim,
                                  dtype=jnp.float32)
    q1, q2 = deeper_qnetwork_forward(state, action, packed)
    jax.block_until_ready((q1, q2))
    r1, r2 = _reference_forward(state, action, params)
    assert q1.shape == (batch, 1) and q2.shape == (batch, 1)
    assert jnp.allclose(q1, r1, atol=1e-4, rtol=1e-4)
    assert jnp.allclose(q2, r2, atol=1e-4, rtol=1e-4)

    # --- multi-step grid + batch padding + non-zero bias fold check ---------
    big_b = 300
    kbs, kba = jax.random.split(k_state)
    state_b = jax.random.normal(kbs, (big_b, num_inputs), jnp.float32)
    action_b = jax.random.normal(kba, (big_b, num_actions), jnp.float32)
    params_b = make_params(k_p2, num_inputs, num_actions, hidden_dim,
                           zero_bias=False)
    packed_b = pack_qnetwork_params(params_b, num_inputs, num_actions,
                                    hidden_dim, dtype=jnp.float32)
    qb1, qb2 = deeper_qnetwork_forward(state_b, action_b, packed_b)
    jax.block_until_ready((qb1, qb2))
    rb1, rb2 = _reference_forward(state_b, action_b, params_b)
    assert qb1.shape == (big_b, 1) and qb2.shape == (big_b, 1)
    assert jnp.allclose(qb1, rb1, atol=1e-4, rtol=1e-4)
    assert jnp.allclose(qb2, rb2, atol=1e-4, rtol=1e-4)

    # --- low-precision path (bf16 default on v6e/v7x; skipped on v5e) -------
    auto_dtype = default_compute_dtype()
    if auto_dtype != jnp.float32:
        packed_lp = pack_qnetwork_params(params, num_inputs, num_actions,
                                         hidden_dim, dtype=auto_dtype)
        ql1, ql2 = deeper_qnetwork_forward(state, action, packed_lp)
        jax.block_until_ready((ql1, ql2))
        assert ql1.shape == (batch, 1) and ql2.shape == (batch, 1)
        assert bool(jnp.all(jnp.isfinite(ql1))) and bool(jnp.all(jnp.isfinite(ql2)))
        # bf16 weights/activations with f32 MXU accumulation: loose tolerance.
        assert jnp.allclose(ql1, r1, atol=5e-2, rtol=5e-2)
        assert jnp.allclose(ql2, r2, atol=5e-2, rtol=5e-2)

    print("KERNEL_OK")
</pallas_src>

<mosaic_0001>
module attributes {stable_mosaic.version = 11 : i64} {
  func.func @_qnet_kernel(%arg0: i32, %arg1: memref<8x24xf32, #tpu.memory_space<vmem>>, %arg2: memref<24x128xf32, #tpu.memory_space<vmem>>, %arg3: memref<9x128x128xf32, #tpu.memory_space<vmem>>, %arg4: memref<8x128xf32, #tpu.memory_space<vmem>>) attributes {dimension_semantics = [#tpu.dimension_semantics<parallel>], iteration_bounds = array<i64: 1>, scalar_prefetch = 0 : i64, scratch_operands = 0 : i64, tpu.core_type = #tpu.core_type<tc>, window_params = [{transform_indices = @transform_0, window_bounds = array<i64: 8, 24>}, {pipeline_mode = #tpu.pipeline_mode<synchronous>, transform_indices = @transform_1, window_bounds = array<i64: 24, 128>}, {pipeline_mode = #tpu.pipeline_mode<synchronous>, transform_indices = @transform_2, window_bounds = array<i64: 9, 128, 128>}, {transform_indices = @transform_3, window_bounds = array<i64: 8, 128>}]} {
    %c0 = arith.constant 0 : index
    %c0_0 = arith.constant 0 : index
    %0 = vector.load %arg1[%c0, %c0_0] : memref<8x24xf32, #tpu.memory_space<vmem>>, vector<8x24xf32>
    %c0_1 = arith.constant 0 : index
    %c0_2 = arith.constant 0 : index
    %1 = vector.load %arg2[%c0_1, %c0_2] : memref<24x128xf32, #tpu.memory_space<vmem>>, vector<24x128xf32>
    %cst = arith.constant dense<0.000000e+00> : vector<8x128xf32>
    %2 = tpu.matmul %0, %1, %cst {dimension_numbers = #tpu.dot_dimension_numbers<[1], [0], [0], [1], [0, 0, 1, 1], [], []>} : vector<8x24xf32>, vector<24x128xf32>, vector<8x128xf32> -> vector<8x128xf32>
    %cst_3 = arith.constant 0.000000e+00 : f32
    %3 = vector.broadcast %cst_3 : f32 to vector<8x128xf32>
    %4 = arith.maximumf %2, %3 : vector<8x128xf32>
    %c0_4 = arith.constant 0 : index
    %c0_5 = arith.constant 0 : index
    %c0_6 = arith.constant 0 : index
    %5 = vector.load %arg3[%c0_4, %c0_5, %c0_6] : memref<9x128x128xf32, #tpu.memory_space<vmem>>, vector<1x128x128xf32>
    %6 = vector.shape_cast %5 : vector<1x128x128xf32> to vector<128x128xf32>
    %cst_7 = arith.constant dense<0.000000e+00> : vector<8x128xf32>
    %7 = tpu.matmul %4, %6, %cst_7 {dimension_numbers = #tpu.dot_dimension_numbers<[1], [0], [0], [1], [0, 0, 1, 1], [], []>} : vector<8x128xf32>, vector<128x128xf32>, vector<8x128xf32> -> vector<8x128xf32>
    %cst_8 = arith.constant 0.000000e+00 : f32
    %8 = vector.broadcast %cst_8 : f32 to vector<8x128xf32>
    %9 = arith.maximumf %7, %8 : vector<8x128xf32>
    %c1 = arith.constant 1 : index
    %c0_9 = arith.constant 0 : index
    %c0_10 = arith.constant 0 : index
    %10 = vector.load %arg3[%c1, %c0_9, %c0_10] : memref<9x128x128xf32, #tpu.memory_space<vmem>>, vector<1x128x128xf32>
    %11 = vector.shape_cast %10 : vector<1x128x128xf32> to vector<128x128xf32>
    %cst_11 = arith.constant dense<0.000000e+00> : vector<8x128xf32>
    %12 = tpu.matmul %9, %11, %cst_11 {dimension_numbers = #tpu.dot_dimension_numbers<[1], [0], [0], [1], [0, 0, 1, 1], [], []>} : vector<8x128xf32>, vector<128x128xf32>, vector<8x128xf32> -> vector<8x128xf32>
    %cst_12 = arith.constant 0.000000e+00 : f32
    %13 = vector.broadcast %cst_12 : f32 to vector<8x128xf32>
    %14 = arith.maximumf %12, %13 : vector<8x128xf32>
    %c2 = arith.constant 2 : index
    %c0_13 = arith.constant 0 : index
    %c0_14 = arith.constant 0 : index
    %15 = vector.load %arg3[%c2, %c0_13, %c0_14] : memref<9x128x128xf32, #tpu.memory_space<vmem>>, vector<1x128x128xf32>
    %16 = vector.shape_cast %15 : vector<1x128x128xf32> to vector<128x128xf32>
    %cst_15 = arith.constant dense<0.000000e+00> : vector<8x128xf32>
    %17 = tpu.matmul %14, %16, %cst_15 {dimension_numbers = #tpu.dot_dimension_numbers<[1], [0], [0], [1], [0, 0, 1, 1], [], []>} : vector<8x128xf32>, vector<128x128xf32>, vector<8x128xf32> -> vector<8x128xf32>
    %cst_16 = arith.constant 0.000000e+00 : f32
    %18 = vector.broadcast %cst_16 : f32 to vector<8x128xf32>
    %19 = arith.maximumf %17, %18 : vector<8x128xf32>
    %c3 = arith.constant 3 : index
    %c0_17 = arith.constant 0 : index
    %c0_18 = arith.constant 0 : index
    %20 = vector.load %arg3[%c3, %c0_17, %c0_18] : memref<9x128x128xf32, #tpu.memory_space<vmem>>, vector<1x128x128xf32>
    %21 = vector.shape_cast %20 : vector<1x128x128xf32> to vector<128x128xf32>
    %cst_19 = arith.constant dense<0.000000e+00> : vector<8x128xf32>
    %22 = tpu.matmul %19, %21, %cst_19 {dimension_numbers = #tpu.dot_dimension_numbers<[1], [0], [0], [1], [0, 0, 1, 1], [], []>} : vector<8x128xf32>, vector<128x128xf32>, vector<8x128xf32> -> vector<8x128xf32>
    %cst_20 = arith.constant 0.000000e+00 : f32
    %23 = vector.broadcast %cst_20 : f32 to vector<8x128xf32>
    %24 = arith.maximumf %22, %23 : vector<8x128xf32>
    %c4 = arith.constant 4 : index
    %c0_21 = arith.constant 0 : index
    %c0_22 = arith.constant 0 : index
    %25 = vector.load %arg3[%c4, %c0_21, %c0_22] : memref<9x128x128xf32, #tpu.memory_space<vmem>>, vector<1x128x128xf32>
    %26 = vector.shape_cast %25 : vector<1x128x128xf32> to vector<128x128xf32>
    %cst_23 = arith.constant dense<0.000000e+00> : vector<8x128xf32>
    %27 = tpu.matmul %24, %26, %cst_23 {dimension_numbers = #tpu.dot_dimension_numbers<[1], [0], [0], [1], [0, 0, 1, 1], [], []>} : vector<8x128xf32>, vector<128x128xf32>, vector<8x128xf32> -> vector<8x128xf32>
    %cst_24 = arith.constant 0.000000e+00 : f32
    %28 = vector.broadcast %cst_24 : f32 to vector<8x128xf32>
    %29 = arith.maximumf %27, %28 : vector<8x128xf32>
    %c5 = arith.constant 5 : index
    %c0_25 = arith.constant 0 : index
    %c0_26 = arith.constant 0 : index
    %30 = vector.load %arg3[%c5, %c0_25, %c0_26] : memref<9x128x128xf32, #tpu.memory_space<vmem>>, vector<1x128x128xf32>
    %31 = vector.shape_cast %30 : vector<1x128x128xf32> to vector<128x128xf32>
    %cst_27 = arith.constant dense<0.000000e+00> : vector<8x128xf32>
    %32 = tpu.matmul %29, %31, %cst_27 {dimension_numbers = #tpu.dot_dimension_numbers<[1], [0], [0], [1], [0, 0, 1, 1], [], []>} : vector<8x128xf32>, vector<128x128xf32>, vector<8x128xf32> -> vector<8x128xf32>
    %cst_28 = arith.constant 0.000000e+00 : f32
    %33 = vector.broadcast %cst_28 : f32 to vector<8x128xf32>
    %34 = arith.maximumf %32, %33 : vector<8x128xf32>
    %c6 = arith.constant 6 : index
    %c0_29 = arith.constant 0 : index
    %c0_30 = arith.constant 0 : index
    %35 = vector.load %arg3[%c6, %c0_29, %c0_30] : memref<9x128x128xf32, #tpu.memory_space<vmem>>, vector<1x128x128xf32>
    %36 = vector.shape_cast %35 : vector<1x128x128xf32> to vector<128x128xf32>
    %cst_31 = arith.constant dense<0.000000e+00> : vector<8x128xf32>
    %37 = tpu.matmul %34, %36, %cst_31 {dimension_numbers = #tpu.dot_dimension_numbers<[1], [0], [0], [1], [0, 0, 1, 1], [], []>} : vector<8x128xf32>, vector<128x128xf32>, vector<8x128xf32> -> vector<8x128xf32>
    %cst_32 = arith.constant 0.000000e+00 : f32
    %38 = vector.broadcast %cst_32 : f32 to vector<8x128xf32>
    %39 = arith.maximumf %37, %38 : vector<8x128xf32>
    %c7 = arith.constant 7 : index
    %c0_33 = arith.constant 0 : index
    %c0_34 = arith.constant 0 : index
    %40 = vector.load %arg3[%c7, %c0_33, %c0_34] : memref<9x128x128xf32, #tpu.memory_space<vmem>>, vector<1x128x128xf32>
    %41 = vector.shape_cast %40 : vector<1x128x128xf32> to vector<128x128xf32>
    %cst_35 = arith.constant dense<0.000000e+00> : vector<8x128xf32>
    %42 = tpu.matmul %39, %41, %cst_35 {dimension_numbers = #tpu.dot_dimension_numbers<[1], [0], [0], [1], [0, 0, 1, 1], [], []>} : vector<8x128xf32>, vector<128x128xf32>, vector<8x128xf32> -> vector<8x128xf32>
    %cst_36 = arith.constant 0.000000e+00 : f32
    %43 = vector.broadcast %cst_36 : f32 to vector<8x128xf32>
    %44 = arith.maximumf %42, %43 : vector<8x128xf32>
    %c8 = arith.constant 8 : index
    %c0_37 = arith.constant 0 : index
    %c0_38 = arith.constant 0 : index
    %45 = vector.load %arg3[%c8, %c0_37, %c0_38] : memref<9x128x128xf32, #tpu.memory_space<vmem>>, vector<1x128x128xf32>
    %46 = vector.shape_cast %45 : vector<1x128x128xf32> to vector<128x128xf32>
    %cst_39 = arith.constant dense<0.000000e+00> : vector<8x128xf32>
    %47 = tpu.matmul %44, %46, %cst_39 {dimension_numbers = #tpu.dot_dimension_numbers<[1], [0], [0], [1], [0, 0, 1, 1], [], []>} : vector<8x128xf32>, vector<128x128xf32>, vector<8x128xf32> -> vector<8x128xf32>
    %c0_40 = arith.constant 0 : index
    %c0_41 = arith.constant 0 : index
    %48 = vector.load %arg4[%c0_40, %c0_41] : memref<8x128xf32, #tpu.memory_space<vmem>>, vector<8x128xf32>
    tpu.vector_store %arg4[%c0_40, %c0_41], %47 {strides = array<i32>} : memref<8x128xf32, #tpu.memory_space<vmem>>, vector<8x128xf32>,
    return
  }
  func.func @transform_0(%arg0: i32) -> (i32, i32) {
    %c0_i32 = arith.constant 0 : i32
    %c0_i32_0 = arith.constant 0 : i32
    return %arg0, %c0_i32 : i32, i32
  }
  func.func @transform_1(%arg0: i32) -> (i32, i32) {
    %c0_i32 = arith.constant 0 : i32
    %c0_i32_0 = arith.constant 0 : i32
    %c0_i32_1 = arith.constant 0 : i32
    return %c0_i32, %c0_i32_0 : i32, i32
  }
  func.func @transform_2(%arg0: i32) -> (i32, i32, i32) {
    %c0_i32 = arith.constant 0 : i32
    %c0_i32_0 = arith.constant 0 : i32
    %c0_i32_1 = arith.constant 0 : i32
    %c0_i32_2 = arith.constant 0 : i32
    return %c0_i32, %c0_i32_0, %c0_i32_1 : i32, i32, i32
  }
  func.func @transform_3(%arg0: i32) -> (i32, i32) {
    %c0_i32 = arith.constant 0 : i32
    %c0_i32_0 = arith.constant 0 : i32
    return %arg0, %c0_i32 : i32, i32
  }
}

module attributes {stable_mosaic.version = 11 : i64} {
  func.func @_qnet_kernel(%arg0: i32, %arg1: memref<8x24xf32, #tpu.memory_space<vmem>>, %arg2: memref<24x128xf32, #tpu.memory_space<vmem>>, %arg3: memref<9x128x128xf32, #tpu.memory_space<vmem>>, %arg4: memref<8x128xf32, #tpu.memory_space<vmem>>) attributes {dimension_semantics = [#tpu.dimension_semantics<parallel>], iteration_bounds = array<i64: 1>, scalar_prefetch = 0 : i64, scratch_operands = 0 : i64, tpu.core_type = #tpu.core_type<tc>, window_params = [{transform_indices = @transform_0, window_bounds = array<i64: 8, 24>}, {pipeline_mode = #tpu.pipeline_mode<synchronous>, transform_indices = @transform_1, window_bounds = array<i64: 24, 128>}, {pipeline_mode = #tpu.pipeline_mode<synchronous>, transform_indices = @transform_2, window_bounds = array<i64: 9, 128, 128>}, {transform_indices = @transform_3, window_bounds = array<i64: 8, 128>}]} {
    %c0 = arith.constant 0 : index
    %c0_0 = arith.constant 0 : index
    %0 = vector.load %arg1[%c0, %c0_0] : memref<8x24xf32, #tpu.memory_space<vmem>>, vector<8x24xf32>
    %c0_1 = arith.constant 0 : index
    %c0_2 = arith.constant 0 : index
    %1 = vector.load %arg2[%c0_1, %c0_2] : memref<24x128xf32, #tpu.memory_space<vmem>>, vector<24x128xf32>
    %cst = arith.constant dense<0.000000e+00> : vector<8x128xf32>
    %2 = tpu.matmul %0, %1, %cst {dimension_numbers = #tpu.dot_dimension_numbers<[1], [0], [0], [1], [0, 0, 1, 1], [], []>} : vector<8x24xf32>, vector<24x128xf32>, vector<8x128xf32> -> vector<8x128xf32>
    %cst_3 = arith.constant 0.000000e+00 : f32
    %3 = vector.broadcast %cst_3 : f32 to vector<8x128xf32>
    %4 = arith.maximumf %2, %3 : vector<8x128xf32>
    %c0_4 = arith.constant 0 : index
    %c0_5 = arith.constant 0 : index
    %c0_6 = arith.constant 0 : index
    %5 = vector.load %arg3[%c0_4, %c0_5, %c0_6] : memref<9x128x128xf32, #tpu.memory_space<vmem>>, vector<1x128x128xf32>
    %6 = vector.shape_cast %5 : vector<1x128x128xf32> to vector<128x128xf32>
    %cst_7 = arith.constant dense<0.000000e+00> : vector<8x128xf32>
    %7 = tpu.matmul %4, %6, %cst_7 {dimension_numbers = #tpu.dot_dimension_numbers<[1], [0], [0], [1], [0, 0, 1, 1], [], []>} : vector<8x128xf32>, vector<128x128xf32>, vector<8x128xf32> -> vector<8x128xf32>
    %cst_8 = arith.constant 0.000000e+00 : f32
    %8 = vector.broadcast %cst_8 : f32 to vector<8x128xf32>
    %9 = arith.maximumf %7, %8 : vector<8x128xf32>
    %c1 = arith.constant 1 : index
    %c0_9 = arith.constant 0 : index
    %c0_10 = arith.constant 0 : index
    %10 = vector.load %arg3[%c1, %c0_9, %c0_10] : memref<9x128x128xf32, #tpu.memory_space<vmem>>, vector<1x128x128xf32>
    %11 = vector.shape_cast %10 : vector<1x128x128xf32> to vector<128x128xf32>
    %cst_11 = arith.constant dense<0.000000e+00> : vector<8x128xf32>
    %12 = tpu.matmul %9, %11, %cst_11 {dimension_numbers = #tpu.dot_dimension_numbers<[1], [0], [0], [1], [0, 0, 1, 1], [], []>} : vector<8x128xf32>, vector<128x128xf32>, vector<8x128xf32> -> vector<8x128xf32>
    %cst_12 = arith.constant 0.000000e+00 : f32
    %13 = vector.broadcast %cst_12 : f32 to vector<8x128xf32>
    %14 = arith.maximumf %12, %13 : vector<8x128xf32>
    %c2 = arith.constant 2 : index
    %c0_13 = arith.constant 0 : index
    %c0_14 = arith.constant 0 : index
    %15 = vector.load %arg3[%c2, %c0_13, %c0_14] : memref<9x128x128xf32, #tpu.memory_space<vmem>>, vector<1x128x128xf32>
    %16 = vector.shape_cast %15 : vector<1x128x128xf32> to vector<128x128xf32>
    %cst_15 = arith.constant dense<0.000000e+00> : vector<8x128xf32>
    %17 = tpu.matmul %14, %16, %cst_15 {dimension_numbers = #tpu.dot_dimension_numbers<[1], [0], [0], [1], [0, 0, 1, 1], [], []>} : vector<8x128xf32>, vector<128x128xf32>, vector<8x128xf32> -> vector<8x128xf32>
    %cst_16 = arith.constant 0.000000e+00 : f32
    %18 = vector.broadcast %cst_16 : f32 to vector<8x128xf32>
    %19 = arith.maximumf %17, %18 : vector<8x128xf32>
    %c3 = arith.constant 3 : index
    %c0_17 = arith.constant 0 : index
    %c0_18 = arith.constant 0 : index
    %20 = vector.load %arg3[%c3, %c0_17, %c0_18] : memref<9x128x128xf32, #tpu.memory_space<vmem>>, vector<1x128x128xf32>
    %21 = vector.shape_cast %20 : vector<1x128x128xf32> to vector<128x128xf32>
    %cst_19 = arith.constant dense<0.000000e+00> : vector<8x128xf32>
    %22 = tpu.matmul %19, %21, %cst_19 {dimension_numbers = #tpu.dot_dimension_numbers<[1], [0], [0], [1], [0, 0, 1, 1], [], []>} : vector<8x128xf32>, vector<128x128xf32>, vector<8x128xf32> -> vector<8x128xf32>
    %cst_20 = arith.constant 0.000000e+00 : f32
    %23 = vector.broadcast %cst_20 : f32 to vector<8x128xf32>
    %24 = arith.maximumf %22, %23 : vector<8x128xf32>
    %c4 = arith.constant 4 : index
    %c0_21 = arith.constant 0 : index
    %c0_22 = arith.constant 0 : index
    %25 = vector.load %arg3[%c4, %c0_21, %c0_22] : memref<9x128x128xf32, #tpu.memory_space<vmem>>, vector<1x128x128xf32>
    %26 = vector.shape_cast %25 : vector<1x128x128xf32> to vector<128x128xf32>
    %cst_23 = arith.constant dense<0.000000e+00> : vector<8x128xf32>
    %27 = tpu.matmul %24, %26, %cst_23 {dimension_numbers = #tpu.dot_dimension_numbers<[1], [0], [0], [1], [0, 0, 1, 1], [], []>} : vector<8x128xf32>, vector<128x128xf32>, vector<8x128xf32> -> vector<8x128xf32>
    %cst_24 = arith.constant 0.000000e+00 : f32
    %28 = vector.broadcast %cst_24 : f32 to vector<8x128xf32>
    %29 = arith.maximumf %27, %28 : vector<8x128xf32>
    %c5 = arith.constant 5 : index
    %c0_25 = arith.constant 0 : index
    %c0_26 = arith.constant 0 : index
    %30 = vector.load %arg3[%c5, %c0_25, %c0_26] : memref<9x128x128xf32, #tpu.memory_space<vmem>>, vector<1x128x128xf32>
    %31 = vector.shape_cast %30 : vector<1x128x128xf32> to vector<128x128xf32>
    %cst_27 = arith.constant dense<0.000000e+00> : vector<8x128xf32>
    %32 = tpu.matmul %29, %31, %cst_27 {dimension_numbers = #tpu.dot_dimension_numbers<[1], [0], [0], [1], [0, 0, 1, 1], [], []>} : vector<8x128xf32>, vector<128x128xf32>, vector<8x128xf32> -> vector<8x128xf32>
    %cst_28 = arith.constant 0.000000e+00 : f32
    %33 = vector.broadcast %cst_28 : f32 to vector<8x128xf32>
    %34 = arith.maximumf %32, %33 : vector<8x128xf32>
    %c6 = arith.constant 6 : index
    %c0_29 = arith.constant 0 : index
    %c0_30 = arith.constant 0 : index
    %35 = vector.load %arg3[%c6, %c0_29, %c0_30] : memref<9x128x128xf32, #tpu.memory_space<vmem>>, vector<1x128x128xf32>
    %36 = vector.shape_cast %35 : vector<1x128x128xf32> to vector<128x128xf32>
    %cst_31 = arith.constant dense<0.000000e+00> : vector<8x128xf32>
    %37 = tpu.matmul %34, %36, %cst_31 {dimension_numbers = #tpu.dot_dimension_numbers<[1], [0], [0], [1], [0, 0, 1, 1], [], []>} : vector<8x128xf32>, vector<128x128xf32>, vector<8x128xf32> -> vector<8x128xf32>
    %cst_32 = arith.constant 0.000000e+00 : f32
    %38 = vector.broadcast %cst_32 : f32 to vector<8x128xf32>
    %39 = arith.maximumf %37, %38 : vector<8x128xf32>
    %c7 = arith.constant 7 : index
    %c0_33 = arith.constant 0 : index
    %c0_34 = arith.constant 0 : index
    %40 = vector.load %arg3[%c7, %c0_33, %c0_34] : memref<9x128x128xf32, #tpu.memory_space<vmem>>, vector<1x128x128xf32>
    %41 = vector.shape_cast %40 : vector<1x128x128xf32> to vector<128x128xf32>
    %cst_35 = arith.constant dense<0.000000e+00> : vector<8x128xf32>
    %42 = tpu.matmul %39, %41, %cst_35 {dimension_numbers = #tpu.dot_dimension_numbers<[1], [0], [0], [1], [0, 0, 1, 1], [], []>} : vector<8x128xf32>, vector<128x128xf32>, vector<8x128xf32> -> vector<8x128xf32>
    %cst_36 = arith.constant 0.000000e+00 : f32
    %43 = vector.broadcast %cst_36 : f32 to vector<8x128xf32>
    %44 = arith.maximumf %42, %43 : vector<8x128xf32>
    %c8 = arith.constant 8 : index
    %c0_37 = arith.constant 0 : index
    %c0_38 = arith.constant 0 : index
    %45 = vector.load %arg3[%c8, %c0_37, %c0_38] : memref<9x128x128xf32, #tpu.memory_space<vmem>>, vector<1x128x128xf32>
    %46 = vector.shape_cast %45 : vector<1x128x128xf32> to vector<128x128xf32>
    %cst_39 = arith.constant dense<0.000000e+00> : vector<8x128xf32>
    %47 = tpu.matmul %44, %46, %cst_39 {dimension_numbers = #tpu.dot_dimension_numbers<[1], [0], [0], [1], [0, 0, 1, 1], [], []>} : vector<8x128xf32>, vector<128x128xf32>, vector<8x128xf32> -> vector<8x128xf32>
    %c0_40 = arith.constant 0 : index
    %c0_41 = arith.constant 0 : index
    %48 = vector.load %arg4[%c0_40, %c0_41] : memref<8x128xf32, #tpu.memory_space<vmem>>, vector<8x128xf32>
    tpu.vector_store %arg4[%c0_40, %c0_41], %47 {strides = array<i32>} : memref<8x128xf32, #tpu.memory_space<vmem>>, vector<8x128xf32>,
    return
  }
  func.func @transform_0(%arg0: i32) -> (i32, i32) {
    %c0_i32 = arith.constant 0 : i32
    %c0_i32_0 = arith.constant 0 : i32
    return %arg0, %c0_i32 : i32, i32
  }
  func.func @transform_1(%arg0: i32) -> (i32, i32) {
    %c0_i32 = arith.constant 0 : i32
    %c0_i32_0 = arith.constant 0 : i32
    %c0_i32_1 = arith.constant 0 : i32
    return %c0_i32, %c0_i32_0 : i32, i32
  }
  func.func @transform_2(%arg0: i32) -> (i32, i32, i32) {
    %c0_i32 = arith.constant 0 : i32
    %c0_i32_0 = arith.constant 0 : i32
    %c0_i32_1 = arith.constant 0 : i32
    %c0_i32_2 = arith.constant 0 : i32
    return %c0_i32, %c0_i32_0, %c0_i32_1 : i32, i32, i32
  }
  func.func @transform_3(%arg0: i32) -> (i32, i32) {
    %c0_i32 = arith.constant 0 : i32
    %c0_i32_0 = arith.constant 0 : i32
    return %arg0, %c0_i32 : i32, i32
  }
}

</mosaic_0001>

<llo_original>
// kernel: tpu_custom_call.1
$region0: #{tpu_custom_call.1}
  #allocation0 [shape = 'u32[]', space=smem, size = 0x4, offset = 0x4, fixed_abs, tag = 'smem constant byte address 0x4 - core index']
  #allocation1 [shape = 'u32[144,128]{1,0:T(1,128)}', space=vmem, size = 0x12000, scoped, tag = 'internal scratch']
  %s0 = inlined_call_operand.hbm [shape: f32[8,24], index: 0, kind: input, shape index: {}]
  %s1 = inlined_call_operand.hbm [shape: f32[24,128], index: 1, kind: input, shape index: {}]
  %s2 = inlined_call_operand.hbm [shape: f32[9,128,128], index: 2, kind: input, shape index: {}]
  %s3 = inlined_call_operand.hbm [shape: f32[8,128], index: 3, kind: output, shape index: {}]
  %s4 = sld [smem:[#allocation0]]
  $region34: #{tpu_custom_call.1} parent=0
    _
  %s6 = ssub.s32 1, %s4
  %s7 = scalar_select 0, %s6, %s4
  $region1: #{tpu_custom_call.1} parent=0
    #allocation2 [shape = 'u8[4096]{0}', space=vmem, size = 0x1000, scoped, tag = 'input window, operand 0, single buffered']
    #allocation3 [shape = 's32[1]{0}', space=sflag, size = 0x4, scoped, tag = 'scoped memory for tpu_custom_call.1']
    #allocation4 [shape = 's32[1]{0}', space=sflag, size = 0x4, scoped, tag = 'scoped memory for tpu_custom_call.1']
    #allocation5 [shape = 'u8[12288]{0}', space=vmem, size = 0x3000, scoped, tag = 'input window, operand 1, single buffered']
    #allocation6 [shape = 's32[1]{0}', space=sflag, size = 0x4, scoped, tag = 'scoped memory for tpu_custom_call.1']
    #allocation7 [shape = 'u8[589824]{0}', space=vmem, size = 0x90000, scoped, tag = 'input window, operand 2, single buffered']
    #allocation8 [shape = 'u8[4096]{0}', space=vmem, size = 0x1000, scoped, tag = 'output window, operand 0, single buffered']
    %8 = vsyncpa [#allocation3], 0
    %9 = vsyncpa [#allocation6], 0
    %10 = vsyncpa [#allocation4], 0
    // Predicated region
    $region2: #{tpu_custom_call.1} parent=1 // pred_check
      _
    $region3: #{tpu_custom_call.1} parent=1 // pred_check_branch
      %12 = sbr.rel (0) target = $region5
    $region4: #{tpu_custom_call.1} parent=1 // pred_region
      %s14 = ssub.s32 128, 128
      %15 = vsyncadd [#allocation3], %s14
      %s17 = sshll.u32 [#allocation2], 4
      %s18 = int_to_ptr.vmem [resolvable:$true] %s17
      %20 = dma.hbm_to_vmem [thread:$0]  %s0, 128, %s18, [#allocation3]
    $region5: #{tpu_custom_call.1} parent=1 // pred_fallthru
      _
    // Predicated region
    $region6: #{tpu_custom_call.1} parent=1 // pred_check
      _
    $region7: #{tpu_custom_call.1} parent=1 // pred_check_branch
      %22 = sbr.rel (0) target = $region9
    $region8: #{tpu_custom_call.1} parent=1 // pred_region
      %s24 = ssub.s32 384, 384
      %25 = vsyncadd [#allocation6], %s24
      %s26 = sshll.u32 [#allocation5], 4
      %s27 = int_to_ptr.vmem [resolvable:$true] %s26
      %32 = dma.hbm_to_vmem [thread:$0]  %s1, 384, %s27, [#allocation6], 128, 128, 8
    $region9: #{tpu_custom_call.1} parent=1 // pred_fallthru
      _
    // Predicated region
    $region10: #{tpu_custom_call.1} parent=1 // pred_check
      _
    $region11: #{tpu_custom_call.1} parent=1 // pred_check_branch
      %34 = sbr.rel (0) target = $region13
    $region12: #{tpu_custom_call.1} parent=1 // pred_region
      %s36 = ssub.s32 18432, 18432
      %37 = vsyncadd [#allocation6], %s36
      %s38 = sshll.u32 [#allocation7], 4
      %s39 = int_to_ptr.vmem [resolvable:$true] %s38
      %44 = dma.hbm_to_vmem [thread:$0]  %s2, 18432, %s39, [#allocation6], 128, 128, 8
    $region13: #{tpu_custom_call.1} parent=1 // pred_fallthru
      _
    // Predicated region
    $region14: #{tpu_custom_call.1} parent=1 // pred_check
      _
    $region15: #{tpu_custom_call.1} parent=1 // pred_check_branch
      %46 = sbr.rel (0) target = $region17
    $region16: #{tpu_custom_call.1} parent=1 // pred_region
      %47 = dma.done [#allocation3], 128
    $region17: #{tpu_custom_call.1} parent=1 // pred_fallthru
      _
    // Predicated region
    $region18: #{tpu_custom_call.1} parent=1 // pred_check
      _
    $region19: #{tpu_custom_call.1} parent=1 // pred_check_branch
      %49 = sbr.rel (0) target = $region21
    $region20: #{tpu_custom_call.1} parent=1 // pred_region
      %50 = dma.done [#allocation6], 384
    $region21: #{tpu_custom_call.1} parent=1 // pred_fallthru
      _
    // Predicated region
    $region22: #{tpu_custom_call.1} parent=1 // pred_check
      _
    $region23: #{tpu_custom_call.1} parent=1 // pred_check_branch
      %52 = sbr.rel (0) target = $region25
    $region24: #{tpu_custom_call.1} parent=1 // pred_region
      %53 = dma.done [#allocation6], 18432
    $region25: #{tpu_custom_call.1} parent=1 // pred_fallthru
      _
    %v54 = vld [vmem:[#allocation2] sm:$0xff]
    %v55 = vld [vmem:[#allocation5] sm:$0xff]
    %v56 = vld [vmem:[#allocation5 + $0x8] sm:$0xff]
    %v57 = vld [vmem:[#allocation5 + $0x10] sm:$0xff]
    %vm58 = vcmask 195584
    %v60 = vsel %vm58, %v54, 0
    %62 = vmatprep.subr.mxu0 0.0
    %63 = vmatpush1.msra.mxu0 %v55
    %64 = vmatprep.subr.mxu0 0.0
    %65 = vmatpush1.msra.mxu0 %v56
    %66 = vmatprep.subr.mxu0 0.0
    %67 = vmatpush1.msra.mxu0 %v57
    %68 = vmatprep.subr.mxu0 0.0
    %69 = vmatpush1.msra.mxu0 0.0
    %70 = vmatprep.subr.mxu0 0.0
    %71 = vmatpush1.msra.mxu0 0.0
    %72 = vmatprep.subr.mxu0 0.0
    %73 = vmatpush1.msra.mxu0 0.0
    %74 = vmatprep.subr.mxu0 0.0
    %75 = vmatpush1.msra.mxu0 0.0
    %76 = vmatprep.subr.mxu0 0.0
    %77 = vmatpush1.msra.mxu0 0.0
    %78 = vmatprep.subr.mxu0 0.0
    %79 = vmatpush1.msra.mxu0 0.0
    %80 = vmatprep.subr.mxu0 0.0
    %81 = vmatpush1.msra.mxu0 0.0
    %82 = vmatprep.subr.mxu0 0.0
    %83 = vmatpush1.msra.mxu0 0.0
    %84 = vmatprep.subr.mxu0 0.0
    %85 = vmatpush1.msra.mxu0 0.0
    %86 = vmatprep.subr.mxu0 0.0
    %87 = vmatpush1.msra.mxu0 0.0
    %88 = vmatprep.subr.mxu0 0.0
    %89 = vmatpush1.msra.mxu0 0.0
    %90 = vmatprep.subr.mxu0 0.0
    %91 = vmatpush1.msra.mxu0 0.0
    %92 = vmatprep.subr.mxu0 0.0
    %93 = vmatpush1.msra.mxu0 0.0
    %94 = vmatprep.subr.mxu0 0.0
    %95 = vmatpush1.msra.mxu0 0.0
    %96 = vmatprep.subr.mxu0 0.0
    %97 = vmatpush1.msra.mxu0 0.0
    %98 = vmatprep.subr.mxu0 0.0
    %99 = vmatpush1.msra.mxu0 0.0
    %100 = vmatprep.subr.mxu0 0.0
    %101 = vmatpush1.msra.mxu0 0.0
    %102 = vmatprep.subr.mxu0 0.0
    %103 = vmatpush1.msra.mxu0 0.0
    %104 = vmatprep.subr.mxu0 0.0
    %105 = vmatpush1.msra.mxu0 0.0
    %106 = vmatprep.subr.mxu0 0.0
    %107 = vmatpush1.msra.mxu0 0.0
    %108 = vmatprep.subr.mxu0 0.0
    %109 = vmatpush1.msra.mxu0 0.0
    %110 = vmatprep.subr.mxu0 0.0
    %111 = vmatpush1.msra.mxu0 0.0
    %112 = vmatprep.subr.mxu0 0.0
    %113 = vmatpush1.msra.mxu0 0.0
    %114 = vmatprep.subr.mxu0 0.0
    %115 = vmatpush1.msra.mxu0 0.0
    %116 = vmatprep.subr.mxu0 0.0
    %117 = vmatpush1.msra.mxu0 0.0
    %118 = vmatprep.subr.mxu0 0.0
    %119 = vmatpush1.msra.mxu0 0.0
    %120 = vmatprep.subr.mxu0 0.0
    %121 = vmatpush1.msra.mxu0 0.0
    %122 = vmatprep.subr.mxu0 0.0
    %123 = vmatpush1.msra.mxu0 0.0
    %124 = vmatprep.subr.mxu0 0.0
    %125 = vmatpush1.msra.mxu0 0.0
    %126 = vmatprep.mubr.f32.mxu0 0.0
    %127 = vmatmul.mubr.f32.gmra.mrb[0].mxu0 %v60
    %v128 = vpop.f32.mrb[0].mxu0
    %v129 = vadd.f32 0.0, %v128
    %v130 = vpop.f32.mrb[0].mxu0
    %131 = vdwg.mxu0
    %v132 = vmax.f32 %v129, 0.0
    %v133 = vld [vmem:[#allocation7] sm:$0xff]
    %v134 = vld [vmem:[#allocation7 + $0x8] sm:$0xff]
    %v135 = vld [vmem:[#allocation7 + $0x10] sm:$0xff]
    %v136 = vld [vmem:[#allocation7 + $0x18] sm:$0xff]
    %v137 = vld [vmem:[#allocation7 + $0x20] sm:$0xff]
    %v138 = vld [vmem:[#allocation7 + $0x28] sm:$0xff]
    %v139 = vld [vmem:[#allocation7 + $0x30] sm:$0xff]
    %v140 = vld [vmem:[#allocation7 + $0x38] sm:$0xff]
    %v141 = vld [vmem:[#allocation7 + $0x40] sm:$0xff]
    %v142 = vld [vmem:[#allocation7 + $0x48] sm:$0xff]
    %v143 = vld [vmem:[#allocation7 + $0x50] sm:$0xff]
    %v144 = vld [vmem:[#allocation7 + $0x58] sm:$0xff]
    %v145 = vld [vmem:[#allocation7 + $0x60] sm:$0xff]
    %v146 = vld [vmem:[#allocation7 + $0x68] sm:$0xff]
    %v147 = vld [vmem:[#allocation7 + $0x70] sm:$0xff]
    %v148 = vld [vmem:[#allocation7 + $0x78] sm:$0xff]
    %149 = vmatprep.subr.mxu0 0.0
    %150 = vmatpush1.msra.mxu0 %v133
    %151 = vmatprep.subr.mxu0 0.0
    %152 = vmatpush1.msra.mxu0 %v134
    %153 = vmatprep.subr.mxu0 0.0
    %154 = vmatpush1.msra.mxu0 %v135
    %155 = vmatprep.subr.mxu0 0.0
    %156 = vmatpush1.msra.mxu0 %v136
    %157 = vmatprep.subr.mxu0 0.0
    %158 = vmatpush1.msra.mxu0 %v137
    %159 = vmatprep.subr.mxu0 0.0
    %160 = vmatpush1.msra.mxu0 %v138
    %161 = vmatprep.subr.mxu0 0.0
    %162 = vmatpush1.msra.mxu0 %v139
    %163 = vmatprep.subr.mxu0 0.0
    %164 = vmatpush1.msra.mxu0 %v140
    %165 = vmatprep.subr.mxu0 0.0
    %166 = vmatpush1.msra.mxu0 %v141
    %167 = vmatprep.subr.mxu0 0.0
    %168 = vmatpush1.msra.mxu0 %v142
    %169 = vmatprep.subr.mxu0 0.0
    %170 = vmatpush1.msra.mxu0 %v143
    %171 = vmatprep.subr.mxu0 0.0
    %172 = vmatpush1.msra.mxu0 %v144
    %173 = vmatprep.subr.mxu0 0.0
    %174 = vmatpush1.msra.mxu0 %v145
    %175 = vmatprep.subr.mxu0 0.0
    %176 = vmatpush1.msra.mxu0 %v146
    %177 = vmatprep.subr.mxu0 0.0
    %178 = vmatpush1.msra.mxu0 %v147
    %179 = vmatprep.subr.mxu0 0.0
    %180 = vmatpush1.msra.mxu0 %v148
    %181 = vmatprep.subr.mxu0 0.0
    %182 = vmatpush1.msra.mxu0 0.0
    %183 = vmatprep.subr.mxu0 0.0
    %184 = vmatpush1.msra.mxu0 0.0
    %185 = vmatprep.subr.mxu0 0.0
    %186 = vmatpush1.msra.mxu0 0.0
    %187 = vmatprep.subr.mxu0 0.0
    %188 = vmatpush1.msra.mxu0 0.0
    %189 = vmatprep.subr.mxu0 0.0
    %190 = vmatpush1.msra.mxu0 0.0
    %191 = vmatprep.subr.mxu0 0.0
    %192 = vmatpush1.msra.mxu0 0.0
    %193 = vmatprep.subr.mxu0 0.0
    %194 = vmatpush1.msra.mxu0 0.0
    %195 = vmatprep.subr.mxu0 0.0
    %196 = vmatpush1.msra.mxu0 0.0
    %197 = vmatprep.subr.mxu0 0.0
    %198 = vmatpush1.msra.mxu0 0.0
    %199 = vmatprep.subr.mxu0 0.0
    %200 = vmatpush1.msra.mxu0 0.0
    %201 = vmatprep.subr.mxu0 0.0
    %202 = vmatpush1.msra.mxu0 0.0
    %203 = vmatprep.subr.mxu0 0.0
    %204 = vmatpush1.msra.mxu0 0.0
    %205 = vmatprep.subr.mxu0 0.0
    %206 = vmatpush1.msra.mxu0 0.0
    %207 = vmatprep.subr.mxu0 0.0
    %208 = vmatpush1.msra.mxu0 0.0
    %209 = vmatprep.subr.mxu0 0.0
    %210 = vmatpush1.msra.mxu0 0.0
    %211 = vmatprep.subr.mxu0 0.0
    %212 = vmatpush1.msra.mxu0 0.0
    %213 = vmatprep.mubr.f32.mxu0 0.0
    %214 = vmatmul.mubr.f32.gmra.mrb[0].mxu0 %v132
    %v215 = vpop.f32.mrb[0].mxu0
    %v216 = vadd.f32 0.0, %v215
    %v217 = vpop.f32.mrb[0].mxu0
    %218 = vdwg.mxu0
    %v219 = vmax.f32 %v216, 0.0
    %s220 = scalar_lea.vmem [#allocation7], 128
    %v221 = vld [vmem:[%s220] sm:$0xff]
    %v222 = vld [vmem:[%s220 + $0x8] sm:$0xff]
    %v223 = vld [vmem:[%s220 + $0x10] sm:$0xff]
    %v224 = vld [vmem:[%s220 + $0x18] sm:$0xff]
    %v225 = vld [vmem:[%s220 + $0x20] sm:$0xff]
    %v226 = vld [vmem:[%s220 + $0x28] sm:$0xff]
    %v227 = vld [vmem:[%s220 + $0x30] sm:$0xff]
    %v228 = vld [vmem:[%s220 + $0x38] sm:$0xff]
    %v229 = vld [vmem:[%s220 + $0x40] sm:$0xff]
    %v230 = vld [vmem:[%s220 + $0x48] sm:$0xff]
    %v231 = vld [vmem:[%s220 + $0x50] sm:$0xff]
    %v232 = vld [vmem:[%s220 + $0x58] sm:$0xff]
    %v233 = vld [vmem:[%s220 + $0x60] sm:$0xff]
    %v234 = vld [vmem:[%s220 + $0x68] sm:$0xff]
    %v235 = vld [vmem:[%s220 + $0x70] sm:$0xff]
    %v236 = vld [vmem:[%s220 + $0x78] sm:$0xff]
    %237 = vmatprep.subr.mxu0 0.0
    %238 = vmatpush1.msra.mxu0 %v221
    %239 = vmatprep.subr.mxu0 0.0
    %240 = vmatpush1.msra.mxu0 %v222
    %241 = vmatprep.subr.mxu0 0.0
    %242 = vmatpush1.msra.mxu0 %v223
    %243 = vmatprep.subr.mxu0 0.0
    %244 = vmatpush1.msra.mxu0 %v224
    %245 = vmatprep.subr.mxu0 0.0
    %246 = vmatpush1.msra.mxu0 %v225
    %247 = vmatprep.subr.mxu0 0.0
    %248 = vmatpush1.msra.mxu0 %v226
    %249 = vmatprep.subr.mxu0 0.0
    %250 = vmatpush1.msra.mxu0 %v227
    %251 = vmatprep.subr.mxu0 0.0
    %252 = vmatpush1.msra.mxu0 %v228
    %253 = vmatprep.subr.mxu0 0.0
    %254 = vmatpush1.msra.mxu0 %v229
    %255 = vmatprep.subr.mxu0 0.0
    %256 = vmatpush1.msra.mxu0 %v230
    %257 = vmatprep.subr.mxu0 0.0
    %258 = vmatpush1.msra.mxu0 %v231
    %259 = vmatprep.subr.mxu0 0.0
    %260 = vmatpush1.msra.mxu0 %v232
    %261 = vmatprep.subr.mxu0 0.0
    %262 = vmatpush1.msra.mxu0 %v233
    %263 = vmatprep.subr.mxu0 0.0
    %264 = vmatpush1.msra.mxu0 %v234
    %265 = vmatprep.subr.mxu0 0.0
    %266 = vmatpush1.msra.mxu0 %v235
    %267 = vmatprep.subr.mxu0 0.0
    %268 = vmatpush1.msra.mxu0 %v236
    %269 = vmatprep.subr.mxu0 0.0
    %270 = vmatpush1.msra.mxu0 0.0
    %271 = vmatprep.subr.mxu0 0.0
    %272 = vmatpush1.msra.mxu0 0.0
    %273 = vmatprep.subr.mxu0 0.0
    %274 = vmatpush1.msra.mxu0 0.0
    %275 = vmatprep.subr.mxu0 0.0
    %276 = vmatpush1.msra.mxu0 0.0
    %277 = vmatprep.subr.mxu0 0.0
    %278 = vmatpush1.msra.mxu0 0.0
    %279 = vmatprep.subr.mxu0 0.0
    %280 = vmatpush1.msra.mxu0 0.0
    %281 = vmatprep.subr.mxu0 0.0
    %282 = vmatpush1.msra.mxu0 0.0
    %283 = vmatprep.subr.mxu0 0.0
    %284 = vmatpush1.msra.mxu0 0.0
    %285 = vmatprep.subr.mxu0 0.0
    %286 = vmatpush1.msra.mxu0 0.0
    %287 = vmatprep.subr.mxu0 0.0
    %288 = vmatpush1.msra.mxu0 0.0
    %289 = vmatprep.subr.mxu0 0.0
    %290 = vmatpush1.msra.mxu0 0.0
    %291 = vmatprep.subr.mxu0 0.0
    %292 = vmatpush1.msra.mxu0 0.0
    %293 = vmatprep.subr.mxu0 0.0
    %294 = vmatpush1.msra.mxu0 0.0
    %295 = vmatprep.subr.mxu0 0.0
    %296 = vmatpush1.msra.mxu0 0.0
    %297 = vmatprep.subr.mxu0 0.0
    %298 = vmatpush1.msra.mxu0 0.0
    %299 = vmatprep.subr.mxu0 0.0
    %300 = vmatpush1.msra.mxu0 0.0
    %301 = vmatprep.mubr.f32.mxu0 0.0
    %302 = vmatmul.mubr.f32.gmra.mrb[0].mxu0 %v219
    %v303 = vpop.f32.mrb[0].mxu0
    %v304 = vadd.f32 0.0, %v303
    %v305 = vpop.f32.mrb[0].mxu0
    %306 = vdwg.mxu0
    %v307 = vmax.f32 %v304, 0.0
    %s308 = scalar_lea.vmem [#allocation7], 256
    %v309 = vld [vmem:[%s308] sm:$0xff]
    %v310 = vld [vmem:[%s308 + $0x8] sm:$0xff]
    %v311 = vld [vmem:[%s308 + $0x10] sm:$0xff]
    %v312 = vld [vmem:[%s308 + $0x18] sm:$0xff]
    %v313 = vld [vmem:[%s308 + $0x20] sm:$0xff]
    %v314 = vld [vmem:[%s308 + $0x28] sm:$0xff]
    %v315 = vld [vmem:[%s308 + $0x30] sm:$0xff]
    %v316 = vld [vmem:[%s308 + $0x38] sm:$0xff]
    %v317 = vld [vmem:[%s308 + $0x40] sm:$0xff]
    %v318 = vld [vmem:[%s308 + $0x48] sm:$0xff]
    %v319 = vld [vmem:[%s308 + $0x50] sm:$0xff]
    %v320 = vld [vmem:[%s308 + $0x58] sm:$0xff]
    %v321 = vld [vmem:[%s308 + $0x60] sm:$0xff]
    %v322 = vld [vmem:[%s308 + $0x68] sm:$0xff]
    %v323 = vld [vmem:[%s308 + $0x70] sm:$0xff]
    %v324 = vld [vmem:[%s308 + $0x78] sm:$0xff]
    %325 = vmatprep.subr.mxu0 0.0
    %326 = vmatpush1.msra.mxu0 %v309
    %327 = vmatprep.subr.mxu0 0.0
    %328 = vmatpush1.msra.mxu0 %v310
    %329 = vmatprep.subr.mxu0 0.0
    %330 = vmatpush1.msra.mxu0 %v311
    %331 = vmatprep.subr.mxu0 0.0
    %332 = vmatpush1.msra.mxu0 %v312
    %333 = vmatprep.subr.mxu0 0.0
    %334 = vmatpush1.msra.mxu0 %v313
    %335 = vmatprep.subr.mxu0 0.0
    %336 = vmatpush1.msra.mxu0 %v314
    %337 = vmatprep.subr.mxu0 0.0
    %338 = vmatpush1.msra.mxu0 %v315
    %339 = vmatprep.subr.mxu0 0.0
    %340 = vmatpush1.msra.mxu0 %v316
    %341 = vmatprep.subr.mxu0 0.0
    %342 = vmatpush1.msra.mxu0 %v317
    %343 = vmatprep.subr.mxu0 0.0
    %344 = vmatpush1.msra.mxu0 %v318
    %345 = vmatprep.subr.mxu0 0.0
    %346 = vmatpush1.msra.mxu0 %v319
    %347 = vmatprep.subr.mxu0 0.0
    %348 = vmatpush1.msra.mxu0 %v320
    %349 = vmatprep.subr.mxu0 0.0
    %350 = vmatpush1.msra.mxu0 %v321
    %351 = vmatprep.subr.mxu0 0.0
    %352 = vmatpush1.msra.mxu0 %v322
    %353 = vmatprep.subr.mxu0 0.0
    %354 = vmatpush1.msra.mxu0 %v323
    %355 = vmatprep.subr.mxu0 0.0
    %356 = vmatpush1.msra.mxu0 %v324
    %357 = vmatprep.subr.mxu0 0.0
    %358 = vmatpush1.msra.mxu0 0.0
    %359 = vmatprep.subr.mxu0 0.0
    %360 = vmatpush1.msra.mxu0 0.0
    %361 = vmatprep.subr.mxu0 0.0
    %362 = vmatpush1.msra.mxu0 0.0
    %363 = vmatprep.subr.mxu0 0.0
    %364 = vmatpush1.msra.mxu0 0.0
    %365 = vmatprep.subr.mxu0 0.0
    %366 = vmatpush1.msra.mxu0 0.0
    %367 = vmatprep.subr.mxu0 0.0
    %368 = vmatpush1.msra.mxu0 0.0
    %369 = vmatprep.subr.mxu0 0.0
    %370 = vmatpush1.msra.mxu0 0.0
    %371 = vmatprep.subr.mxu0 0.0
    %372 = vmatpush1.msra.mxu0 0.0
    %373 = vmatprep.subr.mxu0 0.0
    %374 = vmatpush1.msra.mxu0 0.0
    %375 = vmatprep.subr.mxu0 0.0
    %376 = vmatpush1.msra.mxu0 0.0
    %377 = vmatprep.subr.mxu0 0.0
    %378 = vmatpush1.msra.mxu0 0.0
    %379 = vmatprep.subr.mxu0 0.0
    %380 = vmatpush1.msra.mxu0 0.0
    %381 = vmatprep.subr.mxu0 0.0
    %382 = vmatpush1.msra.mxu0 0.0
    %383 = vmatprep.subr.mxu0 0.0
    %384 = vmatpush1.msra.mxu0 0.0
    %385 = vmatprep.subr.mxu0 0.0
    %386 = vmatpush1.msra.mxu0 0.0
    %387 = vmatprep.subr.mxu0 0.0
    %388 = vmatpush1.msra.mxu0 0.0
    %389 = vmatprep.mubr.f32.mxu0 0.0
    %390 = vmatmul.mubr.f32.gmra.mrb[0].mxu0 %v307
    %v391 = vpop.f32.mrb[0].mxu0
    %v392 = vadd.f32 0.0, %v391
    %v393 = vpop.f32.mrb[0].mxu0
    %394 = vdwg.mxu0
    %v395 = vmax.f32 %v392, 0.0
    %s396 = scalar_lea.vmem [#allocation7], 384
    %v397 = vld [vmem:[%s396] sm:$0xff]
    %v398 = vld [vmem:[%s396 + $0x8] sm:$0xff]
    %v399 = vld [vmem:[%s396 + $0x10] sm:$0xff]
    %v400 = vld [vmem:[%s396 + $0x18] sm:$0xff]
    %v401 = vld [vmem:[%s396 + $0x20] sm:$0xff]
    %v402 = vld [vmem:[%s396 + $0x28] sm:$0xff]
    %v403 = vld [vmem:[%s396 + $0x30] sm:$0xff]
    %v404 = vld [vmem:[%s396 + $0x38] sm:$0xff]
    %v405 = vld [vmem:[%s396 + $0x40] sm:$0xff]
    %v406 = vld [vmem:[%s396 + $0x48] sm:$0xff]
    %v407 = vld [vmem:[%s396 + $0x50] sm:$0xff]
    %v408 = vld [vmem:[%s396 + $0x58] sm:$0xff]
    %v409 = vld [vmem:[%s396 + $0x60] sm:$0xff]
    %v410 = vld [vmem:[%s396 + $0x68] sm:$0xff]
    %v411 = vld [vmem:[%s396 + $0x70] sm:$0xff]
    %v412 = vld [vmem:[%s396 + $0x78] sm:$0xff]
    %413 = vmatprep.subr.mxu0 0.0
    %414 = vmatpush1.msra.mxu0 %v397
    %415 = vmatprep.subr.mxu0 0.0
    %416 = vmatpush1.msra.mxu0 %v398
    %417 = vmatprep.subr.mxu0 0.0
    %418 = vmatpush1.msra.mxu0 %v399
    %419 = vmatprep.subr.mxu0 0.0
    %420 = vmatpush1.msra.mxu0 %v400
    %421 = vmatprep.subr.mxu0 0.0
    %422 = vmatpush1.msra.mxu0 %v401
    %423 = vmatprep.subr.mxu0 0.0
    %424 = vmatpush1.msra.mxu0 %v402
    %425 = vmatprep.subr.mxu0 0.0
    %426 = vmatpush1.msra.mxu0 %v403
    %427 = vmatprep.subr.mxu0 0.0
    %428 = vmatpush1.msra.mxu0 %v404
    %429 = vmatprep.subr.mxu0 0.0
    %430 = vmatpush1.msra.mxu0 %v405
    %431 = vmatprep.subr.mxu0 0.0
    %432 = vmatpush1.msra.mxu0 %v406
    %433 = vmatprep.subr.mxu0 0.0
    %434 = vmatpush1.msra.mxu0 %v407
    %435 = vmatprep.subr.mxu0 0.0
    %436 = vmatpush1.msra.mxu0 %v408
    %437 = vmatprep.subr.mxu0 0.0
    %438 = vmatpush1.msra.mxu0 %v409
    %439 = vmatprep.subr.mxu0 0.0
    %440 = vmatpush1.msra.mxu0 %v410
    %441 = vmatprep.subr.mxu0 0.0
    %442 = vmatpush1.msra.mxu0 %v411
    %443 = vmatprep.subr.mxu0 0.0
    %444 = vmatpush1.msra.mxu0 %v412
    %445 = vmatprep.subr.mxu0 0.0
    %446 = vmatpush1.msra.mxu0 0.0
    %447 = vmatprep.subr.mxu0 0.0
    %448 = vmatpush1.msra.mxu0 0.0
    %449 = vmatprep.subr.mxu0 0.0
    %450 = vmatpush1.msra.mxu0 0.0
    %451 = vmatprep.subr.mxu0 0.0
    %452 = vmatpush1.msra.mxu0 0.0
    %453 = vmatprep.subr.mxu0 0.0
    %454 = vmatpush1.msra.mxu0 0.0
    %455 = vmatprep.subr.mxu0 0.0
    %456 = vmatpush1.msra.mxu0 0.0
    %457 = vmatprep.subr.mxu0 0.0
    %458 = vmatpush1.msra.mxu0 0.0
    %459 = vmatprep.subr.mxu0 0.0
    %460 = vmatpush1.msra.mxu0 0.0
    %461 = vmatprep.subr.mxu0 0.0
    %462 = vmatpush1.msra.mxu0 0.0
    %463 = vmatprep.subr.mxu0 0.0
    %464 = vmatpush1.msra.mxu0 0.0
    %465 = vmatprep.subr.mxu0 0.0
    %466 = vmatpush1.msra.mxu0 0.0
    %467 = vmatprep.subr.mxu0 0.0
    %468 = vmatpush1.msra.mxu0 0.0
    %469 = vmatprep.subr.mxu0 0.0
    %470 = vmatpush1.msra.mxu0 0.0
    %471 = vmatprep.subr.mxu0 0.0
    %472 = vmatpush1.msra.mxu0 0.0
    %473 = vmatprep.subr.mxu0 0.0
    %474 = vmatpush1.msra.mxu0 0.0
    %475 = vmatprep.subr.mxu0 0.0
    %476 = vmatpush1.msra.mxu0 0.0
    %477 = vmatprep.mubr.f32.mxu0 0.0
    %478 = vmatmul.mubr.f32.gmra.mrb[0].mxu0 %v395
    %v479 = vpop.f32.mrb[0].mxu0
    %v480 = vadd.f32 0.0, %v479
    %v481 = vpop.f32.mrb[0].mxu0
    %482 = vdwg.mxu0
    %v483 = vmax.f32 %v480, 0.0
    %s484 = scalar_lea.vmem [#allocation7], 512
    %v485 = vld [vmem:[%s484] sm:$0xff]
    %v486 = vld [vmem:[%s484 + $0x8] sm:$0xff]
    %v487 = vld [vmem:[%s484 + $0x10] sm:$0xff]
    %v488 = vld [vmem:[%s484 + $0x18] sm:$0xff]
    %v489 = vld [vmem:[%s484 + $0x20] sm:$0xff]
    %v490 = vld [vmem:[%s484 + $0x28] sm:$0xff]
    %v491 = vld [vmem:[%s484 + $0x30] sm:$0xff]
    %v492 = vld [vmem:[%s484 + $0x38] sm:$0xff]
    %v493 = vld [vmem:[%s484 + $0x40] sm:$0xff]
    %v494 = vld [vmem:[%s484 + $0x48] sm:$0xff]
    %v495 = vld [vmem:[%s484 + $0x50] sm:$0xff]
    %v496 = vld [vmem:[%s484 + $0x58] sm:$0xff]
    %v497 = vld [vmem:[%s484 + $0x60] sm:$0xff]
    %v498 = vld [vmem:[%s484 + $0x68] sm:$0xff]
    %v499 = vld [vmem:[%s484 + $0x70] sm:$0xff]
    %v500 = vld [vmem:[%s484 + $0x78] sm:$0xff]
    %501 = vmatprep.subr.mxu0 0.0
    %502 = vmatpush1.msra.mxu0 %v485
    %503 = vmatprep.subr.mxu0 0.0
    %504 = vmatpush1.msra.mxu0 %v486
    %505 = vmatprep.subr.mxu0 0.0
    %506 = vmatpush1.msra.mxu0 %v487
    %507 = vmatprep.subr.mxu0 0.0
    %508 = vmatpush1.msra.mxu0 %v488
    %509 = vmatprep.subr.mxu0 0.0
    %510 = vmatpush1.msra.mxu0 %v489
    %511 = vmatprep.subr.mxu0 0.0
    %512 = vmatpush1.msra.mxu0 %v490
    %513 = vmatprep.subr.mxu0 0.0
    %514 = vmatpush1.msra.mxu0 %v491
    %515 = vmatprep.subr.mxu0 0.0
    %516 = vmatpush1.msra.mxu0 %v492
    %517 = vmatprep.subr.mxu0 0.0
    %518 = vmatpush1.msra.mxu0 %v493
    %519 = vmatprep.subr.mxu0 0.0
    %520 = vmatpush1.msra.mxu0 %v494
    %521 = vmatprep.subr.mxu0 0.0
    %522 = vmatpush1.msra.mxu0 %v495
    %523 = vmatprep.subr.mxu0 0.0
    %524 = vmatpush1.msra.mxu0 %v496
    %525 = vmatprep.subr.mxu0 0.0
    %526 = vmatpush1.msra.mxu0 %v497
    %527 = vmatprep.subr.mxu0 0.0
    %528 = vmatpush1.msra.mxu0 %v498
    %529 = vmatprep.subr.mxu0 0.0
    %530 = vmatpush1.msra.mxu0 %v499
    %531 = vmatprep.subr.mxu0 0.0
    %532 = vmatpush1.msra.mxu0 %v500
    %533 = vmatprep.subr.mxu0 0.0
    %534 = vmatpush1.msra.mxu0 0.0
    %535 = vmatprep.subr.mxu0 0.0
    %536 = vmatpush1.msra.mxu0 0.0
    %537 = vmatprep.subr.mxu0 0.0
    %538 = vmatpush1.msra.mxu0 0.0
    %539 = vmatprep.subr.mxu0 0.0
    %540 = vmatpush1.msra.mxu0 0.0
    %541 = vmatprep.subr.mxu0 0.0
    %542 = vmatpush1.msra.mxu0 0.0
    %543 = vmatprep.subr.mxu0 0.0
    %544 = vmatpush1.msra.mxu0 0.0
    %545 = vmatprep.subr.mxu0 0.0
    %546 = vmatpush1.msra.mxu0 0.0
    %547 = vmatprep.subr.mxu0 0.0
    %548 = vmatpush1.msra.mxu0 0.0
    %549 = vmatprep.subr.mxu0 0.0
    %550 = vmatpush1.msra.mxu0 0.0
    %551 = vmatprep.subr.mxu0 0.0
    %552 = vmatpush1.msra.mxu0 0.0
    %553 = vmatprep.subr.mxu0 0.0
    %554 = vmatpush1.msra.mxu0 0.0
    %555 = vmatprep.subr.mxu0 0.0
    %556 = vmatpush1.msra.mxu0 0.0
    %557 = vmatprep.subr.mxu0 0.0
    %558 = vmatpush1.msra.mxu0 0.0
    %559 = vmatprep.subr.mxu0 0.0
    %560 = vmatpush1.msra.mxu0 0.0
    %561 = vmatprep.subr.mxu0 0.0
    %562 = vmatpush1.msra.mxu0 0.0
    %563 = vmatprep.subr.mxu0 0.0
    %564 = vmatpush1.msra.mxu0 0.0
    %565 = vmatprep.mubr.f32.mxu0 0.0
    %566 = vmatmul.mubr.f32.gmra.mrb[0].mxu0 %v483
    %v567 = vpop.f32.mrb[0].mxu0
    %v568 = vadd.f32 0.0, %v567
    %v569 = vpop.f32.mrb[0].mxu0
    %570 = vdwg.mxu0
    %v571 = vmax.f32 %v568, 0.0
    %s572 = scalar_lea.vmem [#allocation7], 640
    %v573 = vld [vmem:[%s572] sm:$0xff]
    %v574 = vld [vmem:[%s572 + $0x8] sm:$0xff]
    %v575 = vld [vmem:[%s572 + $0x10] sm:$0xff]
    %v576 = vld [vmem:[%s572 + $0x18] sm:$0xff]
    %v577 = vld [vmem:[%s572 + $0x20] sm:$0xff]
    %v578 = vld [vmem:[%s572 + $0x28] sm:$0xff]
    %v579 = vld [vmem:[%s572 + $0x30] sm:$0xff]
    %v580 = vld [vmem:[%s572 + $0x38] sm:$0xff]
    %v581 = vld [vmem:[%s572 + $0x40] sm:$0xff]
    %v582 = vld [vmem:[%s572 + $0x48] sm:$0xff]
    %v583 = vld [vmem:[%s572 + $0x50] sm:$0xff]
    %v584 = vld [vmem:[%s572 + $0x58] sm:$0xff]
    %v585 = vld [vmem:[%s572 + $0x60] sm:$0xff]
    %v586 = vld [vmem:[%s572 + $0x68] sm:$0xff]
    %v587 = vld [vmem:[%s572 + $0x70] sm:$0xff]
    %v588 = vld [vmem:[%s572 + $0x78] sm:$0xff]
    %589 = vmatprep.subr.mxu0 0.0
    %590 = vmatpush1.msra.mxu0 %v573
    %591 = vmatprep.subr.mxu0 0.0
    %592 = vmatpush1.msra.mxu0 %v574
    %593 = vmatprep.subr.mxu0 0.0
    %594 = vmatpush1.msra.mxu0 %v575
    %595 = vmatprep.subr.mxu0 0.0
    %596 = vmatpush1.msra.mxu0 %v576
    %597 = vmatprep.subr.mxu0 0.0
    %598 = vmatpush1.msra.mxu0 %v577
    %599 = vmatprep.subr.mxu0 0.0
    %600 = vmatpush1.msra.mxu0 %v578
    %601 = vmatprep.subr.mxu0 0.0
    %602 = vmatpush1.msra.mxu0 %v579
    %603 = vmatprep.subr.mxu0 0.0
    %604 = vmatpush1.msra.mxu0 %v580
    %605 = vmatprep.subr.mxu0 0.0
    %606 = vmatpush1.msra.mxu0 %v581
    %607 = vmatprep.subr.mxu0 0.0
    %608 = vmatpush1.msra.mxu0 %v582
    %609 = vmatprep.subr.mxu0 0.0
    %610 = vmatpush1.msra.mxu0 %v583
    %611 = vmatprep.subr.mxu0 0.0
    %612 = vmatpush1.msra.mxu0 %v584
    %613 = vmatprep.subr.mxu0 0.0
    %614 = vmatpush1.msra.mxu0 %v585
    %615 = vmatprep.subr.mxu0 0.0
    %616 = vmatpush1.msra.mxu0 %v586
    %617 = vmatprep.subr.mxu0 0.0
    %618 = vmatpush1.msra.mxu0 %v587
    %619 = vmatprep.subr.mxu0 0.0
    %620 = vmatpush1.msra.mxu0 %v588
    %621 = vmatprep.subr.mxu0 0.0
    %622 = vmatpush1.msra.mxu0 0.0
    %623 = vmatprep.subr.mxu0 0.0
    %624 = vmatpush1.msra.mxu0 0.0
    %625 = vmatprep.subr.mxu0 0.0
    %626 = vmatpush1.msra.mxu0 0.0
    %627 = vmatprep.subr.mxu0 0.0
    %628 = vmatpush1.msra.mxu0 0.0
    %629 = vmatprep.subr.mxu0 0.0
    %630 = vmatpush1.msra.mxu0 0.0
    %631 = vmatprep.subr.mxu0 0.0
    %632 = vmatpush1.msra.mxu0 0.0
    %633 = vmatprep.subr.mxu0 0.0
    %634 = vmatpush1.msra.mxu0 0.0
    %635 = vmatprep.subr.mxu0 0.0
    %636 = vmatpush1.msra.mxu0 0.0
    %637 = vmatprep.subr.mxu0 0.0
    %638 = vmatpush1.msra.mxu0 0.0
    %639 = vmatprep.subr.mxu0 0.0
    %640 = vmatpush1.msra.mxu0 0.0
    %641 = vmatprep.subr.mxu0 0.0
    %642 = vmatpush1.msra.mxu0 0.0
    %643 = vmatprep.subr.mxu0 0.0
    %644 = vmatpush1.msra.mxu0 0.0
    %645 = vmatprep.subr.mxu0 0.0
    %646 = vmatpush1.msra.mxu0 0.0
    %647 = vmatprep.subr.mxu0 0.0
    %648 = vmatpush1.msra.mxu0 0.0
    %649 = vmatprep.subr.mxu0 0.0
    %650 = vmatpush1.msra.mxu0 0.0
    %651 = vmatprep.subr.mxu0 0.0
    %652 = vmatpush1.msra.mxu0 0.0
    %653 = vmatprep.mubr.f32.mxu0 0.0
    %654 = vmatmul.mubr.f32.gmra.mrb[0].mxu0 %v571
    %v655 = vpop.f32.mrb[0].mxu0
    %v656 = vadd.f32 0.0, %v655
    %v657 = vpop.f32.mrb[0].mxu0
    %658 = vdwg.mxu0
    %v659 = vmax.f32 %v656, 0.0
    %s660 = scalar_lea.vmem [#allocation7], 768
    %v661 = vld [vmem:[%s660] sm:$0xff]
    %v662 = vld [vmem:[%s660 + $0x8] sm:$0xff]
    %v663 = vld [vmem:[%s660 + $0x10] sm:$0xff]
    %v664 = vld [vmem:[%s660 + $0x18] sm:$0xff]
    %v665 = vld [vmem:[%s660 + $0x20] sm:$0xff]
    %v666 = vld [vmem:[%s660 + $0x28] sm:$0xff]
    %v667 = vld [vmem:[%s660 + $0x30] sm:$0xff]
    %v668 = vld [vmem:[%s660 + $0x38] sm:$0xff]
    %v669 = vld [vmem:[%s660 + $0x40] sm:$0xff]
    %v670 = vld [vmem:[%s660 + $0x48] sm:$0xff]
    %v671 = vld [vmem:[%s660 + $0x50] sm:$0xff]
    %v672 = vld [vmem:[%s660 + $0x58] sm:$0xff]
    %v673 = vld [vmem:[%s660 + $0x60] sm:$0xff]
    %v674 = vld [vmem:[%s660 + $0x68] sm:$0xff]
    %v675 = vld [vmem:[%s660 + $0x70] sm:$0xff]
    %v676 = vld [vmem:[%s660 + $0x78] sm:$0xff]
    %677 = vmatprep.subr.mxu0 0.0
    %678 = vmatpush1.msra.mxu0 %v661
    %679 = vmatprep.subr.mxu0 0.0
    %680 = vmatpush1.msra.mxu0 %v662
    %681 = vmatprep.subr.mxu0 0.0
    %682 = vmatpush1.msra.mxu0 %v663
    %683 = vmatprep.subr.mxu0 0.0
    %684 = vmatpush1.msra.mxu0 %v664
    %685 = vmatprep.subr.mxu0 0.0
    %686 = vmatpush1.msra.mxu0 %v665
    %687 = vmatprep.subr.mxu0 0.0
    %688 = vmatpush1.msra.mxu0 %v666
    %689 = vmatprep.subr.mxu0 0.0
    %690 = vmatpush1.msra.mxu0 %v667
    %691 = vmatprep.subr.mxu0 0.0
    %692 = vmatpush1.msra.mxu0 %v668
    %693 = vmatprep.subr.mxu0 0.0
    %694 = vmatpush1.msra.mxu0 %v669
    %695 = vmatprep.subr.mxu0 0.0
    %696 = vmatpush1.msra.mxu0 %v670
    %697 = vmatprep.subr.mxu0 0.0
    %698 = vmatpush1.msra.mxu0 %v671
    %699 = vmatprep.subr.mxu0 0.0
    %700 = vmatpush1.msra.mxu0 %v672
    %701 = vmatprep.subr.mxu0 0.0
    %702 = vmatpush1.msra.mxu0 %v673
    %703 = vmatprep.subr.mxu0 0.0
    %704 = vmatpush1.msra.mxu0 %v674
    %705 = vmatprep.subr.mxu0 0.0
    %706 = vmatpush1.msra.mxu0 %v675
    %707 = vmatprep.subr.mxu0 0.0
    %708 = vmatpush1.msra.mxu0 %v676
    %709 = vmatprep.subr.mxu0 0.0
    %710 = vmatpush1.msra.mxu0 0.0
    %711 = vmatprep.subr.mxu0 0.0
    %712 = vmatpush1.msra.mxu0 0.0
    %713 = vmatprep.subr.mxu0 0.0
    %714 = vmatpush1.msra.mxu0 0.0
    %715 = vmatprep.subr.mxu0 0.0
    %716 = vmatpush1.msra.mxu0 0.0
    %717 = vmatprep.subr.mxu0 0.0
    %718 = vmatpush1.msra.mxu0 0.0
    %719 = vmatprep.subr.mxu0 0.0
    %720 = vmatpush1.msra.mxu0 0.0
    %721 = vmatprep.subr.mxu0 0.0
    %722 = vmatpush1.msra.mxu0 0.0
    %723 = vmatprep.subr.mxu0 0.0
    %724 = vmatpush1.msra.mxu0 0.0
    %725 = vmatprep.subr.mxu0 0.0
    %726 = vmatpush1.msra.mxu0 0.0
    %727 = vmatprep.subr.mxu0 0.0
    %728 = vmatpush1.msra.mxu0 0.0
    %729 = vmatprep.subr.mxu0 0.0
    %730 = vmatpush1.msra.mxu0 0.0
    %731 = vmatprep.subr.mxu0 0.0
    %732 = vmatpush1.msra.mxu0 0.0
    %733 = vmatprep.subr.mxu0 0.0
    %734 = vmatpush1.msra.mxu0 0.0
    %735 = vmatprep.subr.mxu0 0.0
    %736 = vmatpush1.msra.mxu0 0.0
    %737 = vmatprep.subr.mxu0 0.0
    %738 = vmatpush1.msra.mxu0 0.0
    %739 = vmatprep.subr.mxu0 0.0
    %740 = vmatpush1.msra.mxu0 0.0
    %741 = vmatprep.mubr.f32.mxu0 0.0
    %742 = vmatmul.mubr.f32.gmra.mrb[0].mxu0 %v659
    %v743 = vpop.f32.mrb[0].mxu0
    %v744 = vadd.f32 0.0, %v743
    %v745 = vpop.f32.mrb[0].mxu0
    %746 = vdwg.mxu0
    %v747 = vmax.f32 %v744, 0.0
    %s748 = scalar_lea.vmem [#allocation7], 896
    %v749 = vld [vmem:[%s748] sm:$0xff]
    %v750 = vld [vmem:[%s748 + $0x8] sm:$0xff]
    %v751 = vld [vmem:[%s748 + $0x10] sm:$0xff]
    %v752 = vld [vmem:[%s748 + $0x18] sm:$0xff]
    %v753 = vld [vmem:[%s748 + $0x20] sm:$0xff]
    %v754 = vld [vmem:[%s748 + $0x28] sm:$0xff]
    %v755 = vld [vmem:[%s748 + $0x30] sm:$0xff]
    %v756 = vld [vmem:[%s748 + $0x38] sm:$0xff]
    %v757 = vld [vmem:[%s748 + $0x40] sm:$0xff]
    %v758 = vld [vmem:[%s748 + $0x48] sm:$0xff]
    %v759 = vld [vmem:[%s748 + $0x50] sm:$0xff]
    %v760 = vld [vmem:[%s748 + $0x58] sm:$0xff]
    %v761 = vld [vmem:[%s748 + $0x60] sm:$0xff]
    %v762 = vld [vmem:[%s748 + $0x68] sm:$0xff]
    %v763 = vld [vmem:[%s748 + $0x70] sm:$0xff]
    %v764 = vld [vmem:[%s748 + $0x78] sm:$0xff]
    %765 = vmatprep.subr.mxu0 0.0
    %766 = vmatpush1.msra.mxu0 %v749
    %767 = vmatprep.subr.mxu0 0.0
    %768 = vmatpush1.msra.mxu0 %v750
    %769 = vmatprep.subr.mxu0 0.0
    %770 = vmatpush1.msra.mxu0 %v751
    %771 = vmatprep.subr.mxu0 0.0
    %772 = vmatpush1.msra.mxu0 %v752
    %773 = vmatprep.subr.mxu0 0.0
    %774 = vmatpush1.msra.mxu0 %v753
    %775 = vmatprep.subr.mxu0 0.0
    %776 = vmatpush1.msra.mxu0 %v754
    %777 = vmatprep.subr.mxu0 0.0
    %778 = vmatpush1.msra.mxu0 %v755
    %779 = vmatprep.subr.mxu0 0.0
    %780 = vmatpush1.msra.mxu0 %v756
    %781 = vmatprep.subr.mxu0 0.0
    %782 = vmatpush1.msra.mxu0 %v757
    %783 = vmatprep.subr.mxu0 0.0
    %784 = vmatpush1.msra.mxu0 %v758
    %785 = vmatprep.subr.mxu0 0.0
    %786 = vmatpush1.msra.mxu0 %v759
    %787 = vmatprep.subr.mxu0 0.0
    %788 = vmatpush1.msra.mxu0 %v760
    %789 = vmatprep.subr.mxu0 0.0
    %790 = vmatpush1.msra.mxu0 %v761
    %791 = vmatprep.subr.mxu0 0.0
    %792 = vmatpush1.msra.mxu0 %v762
    %793 = vmatprep.subr.mxu0 0.0
    %794 = vmatpush1.msra.mxu0 %v763
    %795 = vmatprep.subr.mxu0 0.0
    %796 = vmatpush1.msra.mxu0 %v764
    %797 = vmatprep.subr.mxu0 0.0
    %798 = vmatpush1.msra.mxu0 0.0
    %799 = vmatprep.subr.mxu0 0.0
    %800 = vmatpush1.msra.mxu0 0.0
    %801 = vmatprep.subr.mxu0 0.0
    %802 = vmatpush1.msra.mxu0 0.0
    %803 = vmatprep.subr.mxu0 0.0
    %804 = vmatpush1.msra.mxu0 0.0
    %805 = vmatprep.subr.mxu0 0.0
    %806 = vmatpush1.msra.mxu0 0.0
    %807 = vmatprep.subr.mxu0 0.0
    %808 = vmatpush1.msra.mxu0 0.0
    %809 = vmatprep.subr.mxu0 0.0
    %810 = vmatpush1.msra.mxu0 0.0
    %811 = vmatprep.subr.mxu0 0.0
    %812 = vmatpush1.msra.mxu0 0.0
    %813 = vmatprep.subr.mxu0 0.0
    %814 = vmatpush1.msra.mxu0 0.0
    %815 = vmatprep.subr.mxu0 0.0
    %816 = vmatpush1.msra.mxu0 0.0
    %817 = vmatprep.subr.mxu0 0.0
    %818 = vmatpush1.msra.mxu0 0.0
    %819 = vmatprep.subr.mxu0 0.0
    %820 = vmatpush1.msra.mxu0 0.0
    %821 = vmatprep.subr.mxu0 0.0
    %822 = vmatpush1.msra.mxu0 0.0
    %823 = vmatprep.subr.mxu0 0.0
    %824 = vmatpush1.msra.mxu0 0.0
    %825 = vmatprep.subr.mxu0 0.0
    %826 = vmatpush1.msra.mxu0 0.0
    %827 = vmatprep.subr.mxu0 0.0
    %828 = vmatpush1.msra.mxu0 0.0
    %829 = vmatprep.mubr.f32.mxu0 0.0
    %830 = vmatmul.mubr.f32.gmra.mrb[0].mxu0 %v747
    %v831 = vpop.f32.mrb[0].mxu0
    %v832 = vadd.f32 0.0, %v831
    %v833 = vpop.f32.mrb[0].mxu0
    %834 = vdwg.mxu0
    %v835 = vmax.f32 %v832, 0.0
    %s836 = scalar_lea.vmem [#allocation7], 1024
    %v837 = vld [vmem:[%s836] sm:$0xff]
    %v838 = vld [vmem:[%s836 + $0x8] sm:$0xff]
    %v839 = vld [vmem:[%s836 + $0x10] sm:$0xff]
    %v840 = vld [vmem:[%s836 + $0x18] sm:$0xff]
    %v841 = vld [vmem:[%s836 + $0x20] sm:$0xff]
    %v842 = vld [vmem:[%s836 + $0x28] sm:$0xff]
    %v843 = vld [vmem:[%s836 + $0x30] sm:$0xff]
    %v844 = vld [vmem:[%s836 + $0x38] sm:$0xff]
    %v845 = vld [vmem:[%s836 + $0x40] sm:$0xff]
    %v846 = vld [vmem:[%s836 + $0x48] sm:$0xff]
    %v847 = vld [vmem:[%s836 + $0x50] sm:$0xff]
    %v848 = vld [vmem:[%s836 + $0x58] sm:$0xff]
    %v849 = vld [vmem:[%s836 + $0x60] sm:$0xff]
    %v850 = vld [vmem:[%s836 + $0x68] sm:$0xff]
    %v851 = vld [vmem:[%s836 + $0x70] sm:$0xff]
    %v852 = vld [vmem:[%s836 + $0x78] sm:$0xff]
    %853 = vmatprep.subr.mxu0 0.0
    %854 = vmatpush1.msra.mxu0 %v837
    %855 = vmatprep.subr.mxu0 0.0
    %856 = vmatpush1.msra.mxu0 %v838
    %857 = vmatprep.subr.mxu0 0.0
    %858 = vmatpush1.msra.mxu0 %v839
    %859 = vmatprep.subr.mxu0 0.0
    %860 = vmatpush1.msra.mxu0 %v840
    %861 = vmatprep.subr.mxu0 0.0
    %862 = vmatpush1.msra.mxu0 %v841
    %863 = vmatprep.subr.mxu0 0.0
    %864 = vmatpush1.msra.mxu0 %v842
    %865 = vmatprep.subr.mxu0 0.0
    %866 = vmatpush1.msra.mxu0 %v843
    %867 = vmatprep.subr.mxu0 0.0
    %868 = vmatpush1.msra.mxu0 %v844
    %869 = vmatprep.subr.mxu0 0.0
    %870 = vmatpush1.msra.mxu0 %v845
    %871 = vmatprep.subr.mxu0 0.0
    %872 = vmatpush1.msra.mxu0 %v846
    %873 = vmatprep.subr.mxu0 0.0
    %874 = vmatpush1.msra.mxu0 %v847
    %875 = vmatprep.subr.mxu0 0.0
    %876 = vmatpush1.msra.mxu0 %v848
    %877 = vmatprep.subr.mxu0 0.0
    %878 = vmatpush1.msra.mxu0 %v849
    %879 = vmatprep.subr.mxu0 0.0
    %880 = vmatpush1.msra.mxu0 %v850
    %881 = vmatprep.subr.mxu0 0.0
    %882 = vmatpush1.msra.mxu0 %v851
    %883 = vmatprep.subr.mxu0 0.0
    %884 = vmatpush1.msra.mxu0 %v852
    %885 = vmatprep.subr.mxu0 0.0
    %886 = vmatpush1.msra.mxu0 0.0
    %887 = vmatprep.subr.mxu0 0.0
    %888 = vmatpush1.msra.mxu0 0.0
    %889 = vmatprep.subr.mxu0 0.0
    %890 = vmatpush1.msra.mxu0 0.0
    %891 = vmatprep.subr.mxu0 0.0
    %892 = vmatpush1.msra.mxu0 0.0
    %893 = vmatprep.subr.mxu0 0.0
    %894 = vmatpush1.msra.mxu0 0.0
    %895 = vmatprep.subr.mxu0 0.0
    %896 = vmatpush1.msra.mxu0 0.0
    %897 = vmatprep.subr.mxu0 0.0
    %898 = vmatpush1.msra.mxu0 0.0
    %899 = vmatprep.subr.mxu0 0.0
    %900 = vmatpush1.msra.mxu0 0.0
    %901 = vmatprep.subr.mxu0 0.0
    %902 = vmatpush1.msra.mxu0 0.0
    %903 = vmatprep.subr.mxu0 0.0
    %904 = vmatpush1.msra.mxu0 0.0
    %905 = vmatprep.subr.mxu0 0.0
    %906 = vmatpush1.msra.mxu0 0.0
    %907 = vmatprep.subr.mxu0 0.0
    %908 = vmatpush1.msra.mxu0 0.0
    %909 = vmatprep.subr.mxu0 0.0
    %910 = vmatpush1.msra.mxu0 0.0
    %911 = vmatprep.subr.mxu0 0.0
    %912 = vmatpush1.msra.mxu0 0.0
    %913 = vmatprep.subr.mxu0 0.0
    %914 = vmatpush1.msra.mxu0 0.0
    %915 = vmatprep.subr.mxu0 0.0
    %916 = vmatpush1.msra.mxu0 0.0
    %917 = vmatprep.mubr.f32.mxu0 0.0
    %918 = vmatmul.mubr.f32.gmra.mrb[0].mxu0 %v835
    %v919 = vpop.f32.mrb[0].mxu0
    %v920 = vadd.f32 0.0, %v919
    %v921 = vpop.f32.mrb[0].mxu0
    %922 = vdwg.mxu0
    %923 = vst [vmem:[#allocation8] sm:$0xff] %v920
    // Predicated region
    $region26: #{tpu_custom_call.1} parent=1 // pred_check
      _
    $region27: #{tpu_custom_call.1} parent=1 // pred_check_branch
      %925 = sbr.rel (0) target = $region29
    $region28: #{tpu_custom_call.1} parent=1 // pred_region
      %s927 = ssub.s32 128, 128
      %928 = vsyncadd [#allocation4], %s927
      %s930 = sshll.u32 [#allocation8], 4
      %s931 = int_to_ptr.vmem [resolvable:$true] %s930
      %933 = dma.vmem_to_hbm [thread:$0]  %s931, 128, %s3, [#allocation4]
    $region29: #{tpu_custom_call.1} parent=1 // pred_fallthru
      _
    // Predicated region
    $region30: #{tpu_custom_call.1} parent=1 // pred_check
      _
    $region31: #{tpu_custom_call.1} parent=1 // pred_check_branch
      %935 = sbr.rel (0) target = $region33
    $region32: #{tpu_custom_call.1} parent=1 // pred_region
      %936 = dma.done [#allocation4], 128
    $region33: #{tpu_custom_call.1} parent=1 // pred_fallthru
      _
    %937 = vsyncpa [#allocation3], 1
    %938 = vsyncpa [#allocation6], 1
    %939 = vsyncpa [#allocation4], 1

// kernel: tpu_custom_call.1
$region0: #{tpu_custom_call.1}
  #allocation0 [shape = 'u32[]', space=smem, size = 0x4, offset = 0x4, fixed_abs, tag = 'smem constant byte address 0x4 - core index']
  #allocation1 [shape = 'u32[144,128]{1,0:T(1,128)}', space=vmem, size = 0x12000, scoped, tag = 'internal scratch']
  %s0 = inlined_call_operand.hbm [shape: f32[8,24], index: 0, kind: input, shape index: {}]
  %s1 = inlined_call_operand.hbm [shape: f32[24,128], index: 1, kind: input, shape index: {}]
  %s2 = inlined_call_operand.hbm [shape: f32[9,128,128], index: 2, kind: input, shape index: {}]
  %s3 = inlined_call_operand.hbm [shape: f32[8,128], index: 3, kind: output, shape index: {}]
  %s4 = sld [smem:[#allocation0]]
  $region34: #{tpu_custom_call.1} parent=0
    _
  %s6 = ssub.s32 1, %s4
  %s7 = scalar_select 0, %s6, %s4
  $region1: #{tpu_custom_call.1} parent=0
    #allocation2 [shape = 'u8[4096]{0}', space=vmem, size = 0x1000, scoped, tag = 'input window, operand 0, single buffered']
    #allocation3 [shape = 's32[1]{0}', space=sflag, size = 0x4, scoped, tag = 'scoped memory for tpu_custom_call.1']
    #allocation4 [shape = 's32[1]{0}', space=sflag, size = 0x4, scoped, tag = 'scoped memory for tpu_custom_call.1']
    #allocation5 [shape = 'u8[12288]{0}', space=vmem, size = 0x3000, scoped, tag = 'input window, operand 1, single buffered']
    #allocation6 [shape = 's32[1]{0}', space=sflag, size = 0x4, scoped, tag = 'scoped memory for tpu_custom_call.1']
    #allocation7 [shape = 'u8[589824]{0}', space=vmem, size = 0x90000, scoped, tag = 'input window, operand 2, single buffered']
    #allocation8 [shape = 'u8[4096]{0}', space=vmem, size = 0x1000, scoped, tag = 'output window, operand 0, single buffered']
    %8 = vsyncpa [#allocation3], 0
    %9 = vsyncpa [#allocation6], 0
    %10 = vsyncpa [#allocation4], 0
    // Predicated region
    $region2: #{tpu_custom_call.1} parent=1 // pred_check
      _
    $region3: #{tpu_custom_call.1} parent=1 // pred_check_branch
      %12 = sbr.rel (0) target = $region5
    $region4: #{tpu_custom_call.1} parent=1 // pred_region
      %s14 = ssub.s32 128, 128
      %15 = vsyncadd [#allocation3], %s14
      %s17 = sshll.u32 [#allocation2], 4
      %s18 = int_to_ptr.vmem [resolvable:$true] %s17
      %20 = dma.hbm_to_vmem [thread:$0]  %s0, 128, %s18, [#allocation3]
    $region5: #{tpu_custom_call.1} parent=1 // pred_fallthru
      _
    // Predicated region
    $region6: #{tpu_custom_call.1} parent=1 // pred_check
      _
    $region7: #{tpu_custom_call.1} parent=1 // pred_check_branch
      %22 = sbr.rel (0) target = $region9
    $region8: #{tpu_custom_call.1} parent=1 // pred_region
      %s24 = ssub.s32 384, 384
      %25 = vsyncadd [#allocation6], %s24
      %s26 = sshll.u32 [#allocation5], 4
      %s27 = int_to_ptr.vmem [resolvable:$true] %s26
      %32 = dma.hbm_to_vmem [thread:$0]  %s1, 384, %s27, [#allocation6], 128, 128, 8
    $region9: #{tpu_custom_call.1} parent=1 // pred_fallthru
      _
    // Predicated region
    $region10: #{tpu_custom_call.1} parent=1 // pred_check
      _
    $region11: #{tpu_custom_call.1} parent=1 // pred_check_branch
      %34 = sbr.rel (0) target = $region13
    $region12: #{tpu_custom_call.1} parent=1 // pred_region
      %s36 = ssub.s32 18432, 18432
      %37 = vsyncadd [#allocation6], %s36
      %s38 = sshll.u32 [#allocation7], 4
      %s39 = int_to_ptr.vmem [resolvable:$true] %s38
      %44 = dma.hbm_to_vmem [thread:$0]  %s2, 18432, %s39, [#allocation6], 128, 128, 8
    $region13: #{tpu_custom_call.1} parent=1 // pred_fallthru
      _
    // Predicated region
    $region14: #{tpu_custom_call.1} parent=1 // pred_check
      _
    $region15: #{tpu_custom_call.1} parent=1 // pred_check_branch
      %46 = sbr.rel (0) target = $region17
    $region16: #{tpu_custom_call.1} parent=1 // pred_region
      %47 = dma.done [#allocation3], 128
    $region17: #{tpu_custom_call.1} parent=1 // pred_fallthru
      _
    // Predicated region
    $region18: #{tpu_custom_call.1} parent=1 // pred_check
      _
    $region19: #{tpu_custom_call.1} parent=1 // pred_check_branch
      %49 = sbr.rel (0) target = $region21
    $region20: #{tpu_custom_call.1} parent=1 // pred_region
      %50 = dma.done [#allocation6], 384
    $region21: #{tpu_custom_call.1} parent=1 // pred_fallthru
      _
    // Predicated region
    $region22: #{tpu_custom_call.1} parent=1 // pred_check
      _
    $region23: #{tpu_custom_call.1} parent=1 // pred_check_branch
      %52 = sbr.rel (0) target = $region25
    $region24: #{tpu_custom_call.1} parent=1 // pred_region
      %53 = dma.done [#allocation6], 18432
    $region25: #{tpu_custom_call.1} parent=1 // pred_fallthru
      _
    %v54 = vld [vmem:[#allocation2] sm:$0xff]
    %v55 = vld [vmem:[#allocation5] sm:$0xff]
    %v56 = vld [vmem:[#allocation5 + $0x8] sm:$0xff]
    %v57 = vld [vmem:[#allocation5 + $0x10] sm:$0xff]
    %vm58 = vcmask 195584
    %v60 = vsel %vm58, %v54, 0
    %62 = vmatprep.subr.mxu0 0.0
    %63 = vmatpush1.msra.mxu0 %v55
    %64 = vmatprep.subr.mxu0 0.0
    %65 = vmatpush1.msra.mxu0 %v56
    %66 = vmatprep.subr.mxu0 0.0
    %67 = vmatpush1.msra.mxu0 %v57
    %68 = vmatprep.subr.mxu0 0.0
    %69 = vmatpush1.msra.mxu0 0.0
    %70 = vmatprep.subr.mxu0 0.0
    %71 = vmatpush1.msra.mxu0 0.0
    %72 = vmatprep.subr.mxu0 0.0
    %73 = vmatpush1.msra.mxu0 0.0
    %74 = vmatprep.subr.mxu0 0.0
    %75 = vmatpush1.msra.mxu0 0.0
    %76 = vmatprep.subr.mxu0 0.0
    %77 = vmatpush1.msra.mxu0 0.0
    %78 = vmatprep.subr.mxu0 0.0
    %79 = vmatpush1.msra.mxu0 0.0
    %80 = vmatprep.subr.mxu0 0.0
    %81 = vmatpush1.msra.mxu0 0.0
    %82 = vmatprep.subr.mxu0 0.0
    %83 = vmatpush1.msra.mxu0 0.0
    %84 = vmatprep.subr.mxu0 0.0
    %85 = vmatpush1.msra.mxu0 0.0
    %86 = vmatprep.subr.mxu0 0.0
    %87 = vmatpush1.msra.mxu0 0.0
    %88 = vmatprep.subr.mxu0 0.0
    %89 = vmatpush1.msra.mxu0 0.0
    %90 = vmatprep.subr.mxu0 0.0
    %91 = vmatpush1.msra.mxu0 0.0
    %92 = vmatprep.subr.mxu0 0.0
    %93 = vmatpush1.msra.mxu0 0.0
    %94 = vmatprep.subr.mxu0 0.0
    %95 = vmatpush1.msra.mxu0 0.0
    %96 = vmatprep.subr.mxu0 0.0
    %97 = vmatpush1.msra.mxu0 0.0
    %98 = vmatprep.subr.mxu0 0.0
    %99 = vmatpush1.msra.mxu0 0.0
    %100 = vmatprep.subr.mxu0 0.0
    %101 = vmatpush1.msra.mxu0 0.0
    %102 = vmatprep.subr.mxu0 0.0
    %103 = vmatpush1.msra.mxu0 0.0
    %104 = vmatprep.subr.mxu0 0.0
    %105 = vmatpush1.msra.mxu0 0.0
    %106 = vmatprep.subr.mxu0 0.0
    %107 = vmatpush1.msra.mxu0 0.0
    %108 = vmatprep.subr.mxu0 0.0
    %109 = vmatpush1.msra.mxu0 0.0
    %110 = vmatprep.subr.mxu0 0.0
    %111 = vmatpush1.msra.mxu0 0.0
    %112 = vmatprep.subr.mxu0 0.0
    %113 = vmatpush1.msra.mxu0 0.0
    %114 = vmatprep.subr.mxu0 0.0
    %115 = vmatpush1.msra.mxu0 0.0
    %116 = vmatprep.subr.mxu0 0.0
    %117 = vmatpush1.msra.mxu0 0.0
    %118 = vmatprep.subr.mxu0 0.0
    %119 = vmatpush1.msra.mxu0 0.0
    %120 = vmatprep.subr.mxu0 0.0
    %121 = vmatpush1.msra.mxu0 0.0
    %122 = vmatprep.subr.mxu0 0.0
    %123 = vmatpush1.msra.mxu0 0.0
    %124 = vmatprep.subr.mxu0 0.0
    %125 = vmatpush1.msra.mxu0 0.0
    %126 = vmatprep.mubr.f32.mxu0 0.0
    %127 = vmatmul.mubr.f32.gmra.mrb[0].mxu0 %v60
    %v128 = vpop.f32.mrb[0].mxu0
    %v129 = vadd.f32 0.0, %v128
    %v130 = vpop.f32.mrb[0].mxu0
    %131 = vdwg.mxu0
    %v132 = vmax.f32 %v129, 0.0
    %v133 = vld [vmem:[#allocation7] sm:$0xff]
    %v134 = vld [vmem:[#allocation7 + $0x8] sm:$0xff]
    %v135 = vld [vmem:[#allocation7 + $0x10] sm:$0xff]
    %v136 = vld [vmem:[#allocation7 + $0x18] sm:$0xff]
    %v137 = vld [vmem:[#allocation7 + $0x20] sm:$0xff]
    %v138 = vld [vmem:[#allocation7 + $0x28] sm:$0xff]
    %v139 = vld [vmem:[#allocation7 + $0x30] sm:$0xff]
    %v140 = vld [vmem:[#allocation7 + $0x38] sm:$0xff]
    %v141 = vld [vmem:[#allocation7 + $0x40] sm:$0xff]
    %v142 = vld [vmem:[#allocation7 + $0x48] sm:$0xff]
    %v143 = vld [vmem:[#allocation7 + $0x50] sm:$0xff]
    %v144 = vld [vmem:[#allocation7 + $0x58] sm:$0xff]
    %v145 = vld [vmem:[#allocation7 + $0x60] sm:$0xff]
    %v146 = vld [vmem:[#allocation7 + $0x68] sm:$0xff]
    %v147 = vld [vmem:[#allocation7 + $0x70] sm:$0xff]
    %v148 = vld [vmem:[#allocation7 + $0x78] sm:$0xff]
    %149 = vmatprep.subr.mxu0 0.0
    %150 = vmatpush1.msra.mxu0 %v133
    %151 = vmatprep.subr.mxu0 0.0
    %152 = vmatpush1.msra.mxu0 %v134
    %153 = vmatprep.subr.mxu0 0.0
    %154 = vmatpush1.msra.mxu0 %v135
    %155 = vmatprep.subr.mxu0 0.0
    %156 = vmatpush1.msra.mxu0 %v136
    %157 = vmatprep.subr.mxu0 0.0
    %158 = vmatpush1.msra.mxu0 %v137
    %159 = vmatprep.subr.mxu0 0.0
    %160 = vmatpush1.msra.mxu0 %v138
    %161 = vmatprep.subr.mxu0 0.0
    %162 = vmatpush1.msra.mxu0 %v139
    %163 = vmatprep.subr.mxu0 0.0
    %164 = vmatpush1.msra.mxu0 %v140
    %165 = vmatprep.subr.mxu0 0.0
    %166 = vmatpush1.msra.mxu0 %v141
    %167 = vmatprep.subr.mxu0 0.0
    %168 = vmatpush1.msra.mxu0 %v142
    %169 = vmatprep.subr.mxu0 0.0
    %170 = vmatpush1.msra.mxu0 %v143
    %171 = vmatprep.subr.mxu0 0.0
    %172 = vmatpush1.msra.mxu0 %v144
    %173 = vmatprep.subr.mxu0 0.0
    %174 = vmatpush1.msra.mxu0 %v145
    %175 = vmatprep.subr.mxu0 0.0
    %176 = vmatpush1.msra.mxu0 %v146
    %177 = vmatprep.subr.mxu0 0.0
    %178 = vmatpush1.msra.mxu0 %v147
    %179 = vmatprep.subr.mxu0 0.0
    %180 = vmatpush1.msra.mxu0 %v148
    %181 = vmatprep.subr.mxu0 0.0
    %182 = vmatpush1.msra.mxu0 0.0
    %183 = vmatprep.subr.mxu0 0.0
    %184 = vmatpush1.msra.mxu0 0.0
    %185 = vmatprep.subr.mxu0 0.0
    %186 = vmatpush1.msra.mxu0 0.0
    %187 = vmatprep.subr.mxu0 0.0
    %188 = vmatpush1.msra.mxu0 0.0
    %189 = vmatprep.subr.mxu0 0.0
    %190 = vmatpush1.msra.mxu0 0.0
    %191 = vmatprep.subr.mxu0 0.0
    %192 = vmatpush1.msra.mxu0 0.0
    %193 = vmatprep.subr.mxu0 0.0
    %194 = vmatpush1.msra.mxu0 0.0
    %195 = vmatprep.subr.mxu0 0.0
    %196 = vmatpush1.msra.mxu0 0.0
    %197 = vmatprep.subr.mxu0 0.0
    %198 = vmatpush1.msra.mxu0 0.0
    %199 = vmatprep.subr.mxu0 0.0
    %200 = vmatpush1.msra.mxu0 0.0
    %201 = vmatprep.subr.mxu0 0.0
    %202 = vmatpush1.msra.mxu0 0.0
    %203 = vmatprep.subr.mxu0 0.0
    %204 = vmatpush1.msra.mxu0 0.0
    %205 = vmatprep.subr.mxu0 0.0
    %206 = vmatpush1.msra.mxu0 0.0
    %207 = vmatprep.subr.mxu0 0.0
    %208 = vmatpush1.msra.mxu0 0.0
    %209 = vmatprep.subr.mxu0 0.0
    %210 = vmatpush1.msra.mxu0 0.0
    %211 = vmatprep.subr.mxu0 0.0
    %212 = vmatpush1.msra.mxu0 0.0
    %213 = vmatprep.mubr.f32.mxu0 0.0
    %214 = vmatmul.mubr.f32.gmra.mrb[0].mxu0 %v132
    %v215 = vpop.f32.mrb[0].mxu0
    %v216 = vadd.f32 0.0, %v215
    %v217 = vpop.f32.mrb[0].mxu0
    %218 = vdwg.mxu0
    %v219 = vmax.f32 %v216, 0.0
    %s220 = scalar_lea.vmem [#allocation7], 128
    %v221 = vld [vmem:[%s220] sm:$0xff]
    %v222 = vld [vmem:[%s220 + $0x8] sm:$0xff]
    %v223 = vld [vmem:[%s220 + $0x10] sm:$0xff]
    %v224 = vld [vmem:[%s220 + $0x18] sm:$0xff]
    %v225 = vld [vmem:[%s220 + $0x20] sm:$0xff]
    %v226 = vld [vmem:[%s220 + $0x28] sm:$0xff]
    %v227 = vld [vmem:[%s220 + $0x30] sm:$0xff]
    %v228 = vld [vmem:[%s220 + $0x38] sm:$0xff]
    %v229 = vld [vmem:[%s220 + $0x40] sm:$0xff]
    %v230 = vld [vmem:[%s220 + $0x48] sm:$0xff]
    %v231 = vld [vmem:[%s220 + $0x50] sm:$0xff]
    %v232 = vld [vmem:[%s220 + $0x58] sm:$0xff]
    %v233 = vld [vmem:[%s220 + $0x60] sm:$0xff]
    %v234 = vld [vmem:[%s220 + $0x68] sm:$0xff]
    %v235 = vld [vmem:[%s220 + $0x70] sm:$0xff]
    %v236 = vld [vmem:[%s220 + $0x78] sm:$0xff]
    %237 = vmatprep.subr.mxu0 0.0
    %238 = vmatpush1.msra.mxu0 %v221
    %239 = vmatprep.subr.mxu0 0.0
    %240 = vmatpush1.msra.mxu0 %v222
    %241 = vmatprep.subr.mxu0 0.0
    %242 = vmatpush1.msra.mxu0 %v223
    %243 = vmatprep.subr.mxu0 0.0
    %244 = vmatpush1.msra.mxu0 %v224
    %245 = vmatprep.subr.mxu0 0.0
    %246 = vmatpush1.msra.mxu0 %v225
    %247 = vmatprep.subr.mxu0 0.0
    %248 = vmatpush1.msra.mxu0 %v226
    %249 = vmatprep.subr.mxu0 0.0
    %250 = vmatpush1.msra.mxu0 %v227
    %251 = vmatprep.subr.mxu0 0.0
    %252 = vmatpush1.msra.mxu0 %v228
    %253 = vmatprep.subr.mxu0 0.0
    %254 = vmatpush1.msra.mxu0 %v229
    %255 = vmatprep.subr.mxu0 0.0
    %256 = vmatpush1.msra.mxu0 %v230
    %257 = vmatprep.subr.mxu0 0.0
    %258 = vmatpush1.msra.mxu0 %v231
    %259 = vmatprep.subr.mxu0 0.0
    %260 = vmatpush1.msra.mxu0 %v232
    %261 = vmatprep.subr.mxu0 0.0
    %262 = vmatpush1.msra.mxu0 %v233
    %263 = vmatprep.subr.mxu0 0.0
    %264 = vmatpush1.msra.mxu0 %v234
    %265 = vmatprep.subr.mxu0 0.0
    %266 = vmatpush1.msra.mxu0 %v235
    %267 = vmatprep.subr.mxu0 0.0
    %268 = vmatpush1.msra.mxu0 %v236
    %269 = vmatprep.subr.mxu0 0.0
    %270 = vmatpush1.msra.mxu0 0.0
    %271 = vmatprep.subr.mxu0 0.0
    %272 = vmatpush1.msra.mxu0 0.0
    %273 = vmatprep.subr.mxu0 0.0
    %274 = vmatpush1.msra.mxu0 0.0
    %275 = vmatprep.subr.mxu0 0.0
    %276 = vmatpush1.msra.mxu0 0.0
    %277 = vmatprep.subr.mxu0 0.0
    %278 = vmatpush1.msra.mxu0 0.0
    %279 = vmatprep.subr.mxu0 0.0
    %280 = vmatpush1.msra.mxu0 0.0
    %281 = vmatprep.subr.mxu0 0.0
    %282 = vmatpush1.msra.mxu0 0.0
    %283 = vmatprep.subr.mxu0 0.0
    %284 = vmatpush1.msra.mxu0 0.0
    %285 = vmatprep.subr.mxu0 0.0
    %286 = vmatpush1.msra.mxu0 0.0
    %287 = vmatprep.subr.mxu0 0.0
    %288 = vmatpush1.msra.mxu0 0.0
    %289 = vmatprep.subr.mxu0 0.0
    %290 = vmatpush1.msra.mxu0 0.0
    %291 = vmatprep.subr.mxu0 0.0
    %292 = vmatpush1.msra.mxu0 0.0
    %293 = vmatprep.subr.mxu0 0.0
    %294 = vmatpush1.msra.mxu0 0.0
    %295 = vmatprep.subr.mxu0 0.0
    %296 = vmatpush1.msra.mxu0 0.0
    %297 = vmatprep.subr.mxu0 0.0
    %298 = vmatpush1.msra.mxu0 0.0
    %299 = vmatprep.subr.mxu0 0.0
    %300 = vmatpush1.msra.mxu0 0.0
    %301 = vmatprep.mubr.f32.mxu0 0.0
    %302 = vmatmul.mubr.f32.gmra.mrb[0].mxu0 %v219
    %v303 = vpop.f32.mrb[0].mxu0
    %v304 = vadd.f32 0.0, %v303
    %v305 = vpop.f32.mrb[0].mxu0
    %306 = vdwg.mxu0
    %v307 = vmax.f32 %v304, 0.0
    %s308 = scalar_lea.vmem [#allocation7], 256
    %v309 = vld [vmem:[%s308] sm:$0xff]
    %v310 = vld [vmem:[%s308 + $0x8] sm:$0xff]
    %v311 = vld [vmem:[%s308 + $0x10] sm:$0xff]
    %v312 = vld [vmem:[%s308 + $0x18] sm:$0xff]
    %v313 = vld [vmem:[%s308 + $0x20] sm:$0xff]
    %v314 = vld [vmem:[%s308 + $0x28] sm:$0xff]
    %v315 = vld [vmem:[%s308 + $0x30] sm:$0xff]
    %v316 = vld [vmem:[%s308 + $0x38] sm:$0xff]
    %v317 = vld [vmem:[%s308 + $0x40] sm:$0xff]
    %v318 = vld [vmem:[%s308 + $0x48] sm:$0xff]
    %v319 = vld [vmem:[%s308 + $0x50] sm:$0xff]
    %v320 = vld [vmem:[%s308 + $0x58] sm:$0xff]
    %v321 = vld [vmem:[%s308 + $0x60] sm:$0xff]
    %v322 = vld [vmem:[%s308 + $0x68] sm:$0xff]
    %v323 = vld [vmem:[%s308 + $0x70] sm:$0xff]
    %v324 = vld [vmem:[%s308 + $0x78] sm:$0xff]
    %325 = vmatprep.subr.mxu0 0.0
    %326 = vmatpush1.msra.mxu0 %v309
    %327 = vmatprep.subr.mxu0 0.0
    %328 = vmatpush1.msra.mxu0 %v310
    %329 = vmatprep.subr.mxu0 0.0
    %330 = vmatpush1.msra.mxu0 %v311
    %331 = vmatprep.subr.mxu0 0.0
    %332 = vmatpush1.msra.mxu0 %v312
    %333 = vmatprep.subr.mxu0 0.0
    %334 = vmatpush1.msra.mxu0 %v313
    %335 = vmatprep.subr.mxu0 0.0
    %336 = vmatpush1.msra.mxu0 %v314
    %337 = vmatprep.subr.mxu0 0.0
    %338 = vmatpush1.msra.mxu0 %v315
    %339 = vmatprep.subr.mxu0 0.0
    %340 = vmatpush1.msra.mxu0 %v316
    %341 = vmatprep.subr.mxu0 0.0
    %342 = vmatpush1.msra.mxu0 %v317
    %343 = vmatprep.subr.mxu0 0.0
    %344 = vmatpush1.msra.mxu0 %v318
    %345 = vmatprep.subr.mxu0 0.0
    %346 = vmatpush1.msra.mxu0 %v319
    %347 = vmatprep.subr.mxu0 0.0
    %348 = vmatpush1.msra.mxu0 %v320
    %349 = vmatprep.subr.mxu0 0.0
    %350 = vmatpush1.msra.mxu0 %v321
    %351 = vmatprep.subr.mxu0 0.0
    %352 = vmatpush1.msra.mxu0 %v322
    %353 = vmatprep.subr.mxu0 0.0
    %354 = vmatpush1.msra.mxu0 %v323
    %355 = vmatprep.subr.mxu0 0.0
    %356 = vmatpush1.msra.mxu0 %v324
    %357 = vmatprep.subr.mxu0 0.0
    %358 = vmatpush1.msra.mxu0 0.0
    %359 = vmatprep.subr.mxu0 0.0
    %360 = vmatpush1.msra.mxu0 0.0
    %361 = vmatprep.subr.mxu0 0.0
    %362 = vmatpush1.msra.mxu0 0.0
    %363 = vmatprep.subr.mxu0 0.0
    %364 = vmatpush1.msra.mxu0 0.0
    %365 = vmatprep.subr.mxu0 0.0
    %366 = vmatpush1.msra.mxu0 0.0
    %367 = vmatprep.subr.mxu0 0.0
    %368 = vmatpush1.msra.mxu0 0.0
    %369 = vmatprep.subr.mxu0 0.0
    %370 = vmatpush1.msra.mxu0 0.0
    %371 = vmatprep.subr.mxu0 0.0
    %372 = vmatpush1.msra.mxu0 0.0
    %373 = vmatprep.subr.mxu0 0.0
    %374 = vmatpush1.msra.mxu0 0.0
    %375 = vmatprep.subr.mxu0 0.0
    %376 = vmatpush1.msra.mxu0 0.0
    %377 = vmatprep.subr.mxu0 0.0
    %378 = vmatpush1.msra.mxu0 0.0
    %379 = vmatprep.subr.mxu0 0.0
    %380 = vmatpush1.msra.mxu0 0.0
    %381 = vmatprep.subr.mxu0 0.0
    %382 = vmatpush1.msra.mxu0 0.0
    %383 = vmatprep.subr.mxu0 0.0
    %384 = vmatpush1.msra.mxu0 0.0
    %385 = vmatprep.subr.mxu0 0.0
    %386 = vmatpush1.msra.mxu0 0.0
    %387 = vmatprep.subr.mxu0 0.0
    %388 = vmatpush1.msra.mxu0 0.0
    %389 = vmatprep.mubr.f32.mxu0 0.0
    %390 = vmatmul.mubr.f32.gmra.mrb[0].mxu0 %v307
    %v391 = vpop.f32.mrb[0].mxu0
    %v392 = vadd.f32 0.0, %v391
    %v393 = vpop.f32.mrb[0].mxu0
    %394 = vdwg.mxu0
    %v395 = vmax.f32 %v392, 0.0
    %s396 = scalar_lea.vmem [#allocation7], 384
    %v397 = vld [vmem:[%s396] sm:$0xff]
    %v398 = vld [vmem:[%s396 + $0x8] sm:$0xff]
    %v399 = vld [vmem:[%s396 + $0x10] sm:$0xff]
    %v400 = vld [vmem:[%s396 + $0x18] sm:$0xff]
    %v401 = vld [vmem:[%s396 + $0x20] sm:$0xff]
    %v402 = vld [vmem:[%s396 + $0x28] sm:$0xff]
    %v403 = vld [vmem:[%s396 + $0x30] sm:$0xff]
    %v404 = vld [vmem:[%s396 + $0x38] sm:$0xff]
    %v405 = vld [vmem:[%s396 + $0x40] sm:$0xff]
    %v406 = vld [vmem:[%s396 + $0x48] sm:$0xff]
    %v407 = vld [vmem:[%s396 + $0x50] sm:$0xff]
    %v408 = vld [vmem:[%s396 + $0x58] sm:$0xff]
    %v409 = vld [vmem:[%s396 + $0x60] sm:$0xff]
    %v410 = vld [vmem:[%s396 + $0x68] sm:$0xff]
    %v411 = vld [vmem:[%s396 + $0x70] sm:$0xff]
    %v412 = vld [vmem:[%s396 + $0x78] sm:$0xff]
    %413 = vmatprep.subr.mxu0 0.0
    %414 = vmatpush1.msra.mxu0 %v397
    %415 = vmatprep.subr.mxu0 0.0
    %416 = vmatpush1.msra.mxu0 %v398
    %417 = vmatprep.subr.mxu0 0.0
    %418 = vmatpush1.msra.mxu0 %v399
    %419 = vmatprep.subr.mxu0 0.0
    %420 = vmatpush1.msra.mxu0 %v400
    %421 = vmatprep.subr.mxu0 0.0
    %422 = vmatpush1.msra.mxu0 %v401
    %423 = vmatprep.subr.mxu0 0.0
    %424 = vmatpush1.msra.mxu0 %v402
    %425 = vmatprep.subr.mxu0 0.0
    %426 = vmatpush1.msra.mxu0 %v403
    %427 = vmatprep.subr.mxu0 0.0
    %428 = vmatpush1.msra.mxu0 %v404
    %429 = vmatprep.subr.mxu0 0.0
    %430 = vmatpush1.msra.mxu0 %v405
    %431 = vmatprep.subr.mxu0 0.0
    %432 = vmatpush1.msra.mxu0 %v406
    %433 = vmatprep.subr.mxu0 0.0
    %434 = vmatpush1.msra.mxu0 %v407
    %435 = vmatprep.subr.mxu0 0.0
    %436 = vmatpush1.msra.mxu0 %v408
    %437 = vmatprep.subr.mxu0 0.0
    %438 = vmatpush1.msra.mxu0 %v409
    %439 = vmatprep.subr.mxu0 0.0
    %440 = vmatpush1.msra.mxu0 %v410
    %441 = vmatprep.subr.mxu0 0.0
    %442 = vmatpush1.msra.mxu0 %v411
    %443 = vmatprep.subr.mxu0 0.0
    %444 = vmatpush1.msra.mxu0 %v412
    %445 = vmatprep.subr.mxu0 0.0
    %446 = vmatpush1.msra.mxu0 0.0
    %447 = vmatprep.subr.mxu0 0.0
    %448 = vmatpush1.msra.mxu0 0.0
    %449 = vmatprep.subr.mxu0 0.0
    %450 = vmatpush1.msra.mxu0 0.0
    %451 = vmatprep.subr.mxu0 0.0
    %452 = vmatpush1.msra.mxu0 0.0
    %453 = vmatprep.subr.mxu0 0.0
    %454 = vmatpush1.msra.mxu0 0.0
    %455 = vmatprep.subr.mxu0 0.0
    %456 = vmatpush1.msra.mxu0 0.0
    %457 = vmatprep.subr.mxu0 0.0
    %458 = vmatpush1.msra.mxu0 0.0
    %459 = vmatprep.subr.mxu0 0.0
    %460 = vmatpush1.msra.mxu0 0.0
    %461 = vmatprep.subr.mxu0 0.0
    %462 = vmatpush1.msra.mxu0 0.0
    %463 = vmatprep.subr.mxu0 0.0
    %464 = vmatpush1.msra.mxu0 0.0
    %465 = vmatprep.subr.mxu0 0.0
    %466 = vmatpush1.msra.mxu0 0.0
    %467 = vmatprep.subr.mxu0 0.0
    %468 = vmatpush1.msra.mxu0 0.0
    %469 = vmatprep.subr.mxu0 0.0
    %470 = vmatpush1.msra.mxu0 0.0
    %471 = vmatprep.subr.mxu0 0.0
    %472 = vmatpush1.msra.mxu0 0.0
    %473 = vmatprep.subr.mxu0 0.0
    %474 = vmatpush1.msra.mxu0 0.0
    %475 = vmatprep.subr.mxu0 0.0
    %476 = vmatpush1.msra.mxu0 0.0
    %477 = vmatprep.mubr.f32.mxu0 0.0
    %478 = vmatmul.mubr.f32.gmra.mrb[0].mxu0 %v395
    %v479 = vpop.f32.mrb[0].mxu0
    %v480 = vadd.f32 0.0, %v479
    %v481 = vpop.f32.mrb[0].mxu0
    %482 = vdwg.mxu0
    %v483 = vmax.f32 %v480, 0.0
    %s484 = scalar_lea.vmem [#allocation7], 512
    %v485 = vld [vmem:[%s484] sm:$0xff]
    %v486 = vld [vmem:[%s484 + $0x8] sm:$0xff]
    %v487 = vld [vmem:[%s484 + $0x10] sm:$0xff]
    %v488 = vld [vmem:[%s484 + $0x18] sm:$0xff]
    %v489 = vld [vmem:[%s484 + $0x20] sm:$0xff]
    %v490 = vld [vmem:[%s484 + $0x28] sm:$0xff]
    %v491 = vld [vmem:[%s484 + $0x30] sm:$0xff]
    %v492 = vld [vmem:[%s484 + $0x38] sm:$0xff]
    %v493 = vld [vmem:[%s484 + $0x40] sm:$0xff]
    %v494 = vld [vmem:[%s484 + $0x48] sm:$0xff]
    %v495 = vld [vmem:[%s484 + $0x50] sm:$0xff]
    %v496 = vld [vmem:[%s484 + $0x58] sm:$0xff]
    %v497 = vld [vmem:[%s484 + $0x60] sm:$0xff]
    %v498 = vld [vmem:[%s484 + $0x68] sm:$0xff]
    %v499 = vld [vmem:[%s484 + $0x70] sm:$0xff]
    %v500 = vld [vmem:[%s484 + $0x78] sm:$0xff]
    %501 = vmatprep.subr.mxu0 0.0
    %502 = vmatpush1.msra.mxu0 %v485
    %503 = vmatprep.subr.mxu0 0.0
    %504 = vmatpush1.msra.mxu0 %v486
    %505 = vmatprep.subr.mxu0 0.0
    %506 = vmatpush1.msra.mxu0 %v487
    %507 = vmatprep.subr.mxu0 0.0
    %508 = vmatpush1.msra.mxu0 %v488
    %509 = vmatprep.subr.mxu0 0.0
    %510 = vmatpush1.msra.mxu0 %v489
    %511 = vmatprep.subr.mxu0 0.0
    %512 = vmatpush1.msra.mxu0 %v490
    %513 = vmatprep.subr.mxu0 0.0
    %514 = vmatpush1.msra.mxu0 %v491
    %515 = vmatprep.subr.mxu0 0.0
    %516 = vmatpush1.msra.mxu0 %v492
    %517 = vmatprep.subr.mxu0 0.0
    %518 = vmatpush1.msra.mxu0 %v493
    %519 = vmatprep.subr.mxu0 0.0
    %520 = vmatpush1.msra.mxu0 %v494
    %521 = vmatprep.subr.mxu0 0.0
    %522 = vmatpush1.msra.mxu0 %v495
    %523 = vmatprep.subr.mxu0 0.0
    %524 = vmatpush1.msra.mxu0 %v496
    %525 = vmatprep.subr.mxu0 0.0
    %526 = vmatpush1.msra.mxu0 %v497
    %527 = vmatprep.subr.mxu0 0.0
    %528 = vmatpush1.msra.mxu0 %v498
    %529 = vmatprep.subr.mxu0 0.0
    %530 = vmatpush1.msra.mxu0 %v499
    %531 = vmatprep.subr.mxu0 0.0
    %532 = vmatpush1.msra.mxu0 %v500
    %533 = vmatprep.subr.mxu0 0.0
    %534 = vmatpush1.msra.mxu0 0.0
    %535 = vmatprep.subr.mxu0 0.0
    %536 = vmatpush1.msra.mxu0 0.0
    %537 = vmatprep.subr.mxu0 0.0
    %538 = vmatpush1.msra.mxu0 0.0
    %539 = vmatprep.subr.mxu0 0.0
    %540 = vmatpush1.msra.mxu0 0.0
    %541 = vmatprep.subr.mxu0 0.0
    %542 = vmatpush1.msra.mxu0 0.0
    %543 = vmatprep.subr.mxu0 0.0
    %544 = vmatpush1.msra.mxu0 0.0
    %545 = vmatprep.subr.mxu0 0.0
    %546 = vmatpush1.msra.mxu0 0.0
    %547 = vmatprep.subr.mxu0 0.0
    %548 = vmatpush1.msra.mxu0 0.0
    %549 = vmatprep.subr.mxu0 0.0
    %550 = vmatpush1.msra.mxu0 0.0
    %551 = vmatprep.subr.mxu0 0.0
    %552 = vmatpush1.msra.mxu0 0.0
    %553 = vmatprep.subr.mxu0 0.0
    %554 = vmatpush1.msra.mxu0 0.0
    %555 = vmatprep.subr.mxu0 0.0
    %556 = vmatpush1.msra.mxu0 0.0
    %557 = vmatprep.subr.mxu0 0.0
    %558 = vmatpush1.msra.mxu0 0.0
    %559 = vmatprep.subr.mxu0 0.0
    %560 = vmatpush1.msra.mxu0 0.0
    %561 = vmatprep.subr.mxu0 0.0
    %562 = vmatpush1.msra.mxu0 0.0
    %563 = vmatprep.subr.mxu0 0.0
    %564 = vmatpush1.msra.mxu0 0.0
    %565 = vmatprep.mubr.f32.mxu0 0.0
    %566 = vmatmul.mubr.f32.gmra.mrb[0].mxu0 %v483
    %v567 = vpop.f32.mrb[0].mxu0
    %v568 = vadd.f32 0.0, %v567
    %v569 = vpop.f32.mrb[0].mxu0
    %570 = vdwg.mxu0
    %v571 = vmax.f32 %v568, 0.0
    %s572 = scalar_lea.vmem [#allocation7], 640
    %v573 = vld [vmem:[%s572] sm:$0xff]
    %v574 = vld [vmem:[%s572 + $0x8] sm:$0xff]
    %v575 = vld [vmem:[%s572 + $0x10] sm:$0xff]
    %v576 = vld [vmem:[%s572 + $0x18] sm:$0xff]
    %v577 = vld [vmem:[%s572 + $0x20] sm:$0xff]
    %v578 = vld [vmem:[%s572 + $0x28] sm:$0xff]
    %v579 = vld [vmem:[%s572 + $0x30] sm:$0xff]
    %v580 = vld [vmem:[%s572 + $0x38] sm:$0xff]
    %v581 = vld [vmem:[%s572 + $0x40] sm:$0xff]
    %v582 = vld [vmem:[%s572 + $0x48] sm:$0xff]
    %v583 = vld [vmem:[%s572 + $0x50] sm:$0xff]
    %v584 = vld [vmem:[%s572 + $0x58] sm:$0xff]
    %v585 = vld [vmem:[%s572 + $0x60] sm:$0xff]
    %v586 = vld [vmem:[%s572 + $0x68] sm:$0xff]
    %v587 = vld [vmem:[%s572 + $0x70] sm:$0xff]
    %v588 = vld [vmem:[%s572 + $0x78] sm:$0xff]
    %589 = vmatprep.subr.mxu0 0.0
    %590 = vmatpush1.msra.mxu0 %v573
    %591 = vmatprep.subr.mxu0 0.0
    %592 = vmatpush1.msra.mxu0 %v574
    %593 = vmatprep.subr.mxu0 0.0
    %594 = vmatpush1.msra.mxu0 %v575
    %595 = vmatprep.subr.mxu0 0.0
    %596 = vmatpush1.msra.mxu0 %v576
    %597 = vmatprep.subr.mxu0 0.0
    %598 = vmatpush1.msra.mxu0 %v577
    %599 = vmatprep.subr.mxu0 0.0
    %600 = vmatpush1.msra.mxu0 %v578
    %601 = vmatprep.subr.mxu0 0.0
    %602 = vmatpush1.msra.mxu0 %v579
    %603 = vmatprep.subr.mxu0 0.0
    %604 = vmatpush1.msra.mxu0 %v580
    %605 = vmatprep.subr.mxu0 0.0
    %606 = vmatpush1.msra.mxu0 %v581
    %607 = vmatprep.subr.mxu0 0.0
    %608 = vmatpush1.msra.mxu0 %v582
    %609 = vmatprep.subr.mxu0 0.0
    %610 = vmatpush1.msra.mxu0 %v583
    %611 = vmatprep.subr.mxu0 0.0
    %612 = vmatpush1.msra.mxu0 %v584
    %613 = vmatprep.subr.mxu0 0.0
    %614 = vmatpush1.msra.mxu0 %v585
    %615 = vmatprep.subr.mxu0 0.0
    %616 = vmatpush1.msra.mxu0 %v586
    %617 = vmatprep.subr.mxu0 0.0
    %618 = vmatpush1.msra.mxu0 %v587
    %619 = vmatprep.subr.mxu0 0.0
    %620 = vmatpush1.msra.mxu0 %v588
    %621 = vmatprep.subr.mxu0 0.0
    %622 = vmatpush1.msra.mxu0 0.0
    %623 = vmatprep.subr.mxu0 0.0
    %624 = vmatpush1.msra.mxu0 0.0
    %625 = vmatprep.subr.mxu0 0.0
    %626 = vmatpush1.msra.mxu0 0.0
    %627 = vmatprep.subr.mxu0 0.0
    %628 = vmatpush1.msra.mxu0 0.0
    %629 = vmatprep.subr.mxu0 0.0
    %630 = vmatpush1.msra.mxu0 0.0
    %631 = vmatprep.subr.mxu0 0.0
    %632 = vmatpush1.msra.mxu0 0.0
    %633 = vmatprep.subr.mxu0 0.0
    %634 = vmatpush1.msra.mxu0 0.0
    %635 = vmatprep.subr.mxu0 0.0
    %636 = vmatpush1.msra.mxu0 0.0
    %637 = vmatprep.subr.mxu0 0.0
    %638 = vmatpush1.msra.mxu0 0.0
    %639 = vmatprep.subr.mxu0 0.0
    %640 = vmatpush1.msra.mxu0 0.0
    %641 = vmatprep.subr.mxu0 0.0
    %642 = vmatpush1.msra.mxu0 0.0
    %643 = vmatprep.subr.mxu0 0.0
    %644 = vmatpush1.msra.mxu0 0.0
    %645 = vmatprep.subr.mxu0 0.0
    %646 = vmatpush1.msra.mxu0 0.0
    %647 = vmatprep.subr.mxu0 0.0
    %648 = vmatpush1.msra.mxu0 0.0
    %649 = vmatprep.subr.mxu0 0.0
    %650 = vmatpush1.msra.mxu0 0.0
    %651 = vmatprep.subr.mxu0 0.0
    %652 = vmatpush1.msra.mxu0 0.0
    %653 = vmatprep.mubr.f32.mxu0 0.0
    %654 = vmatmul.mubr.f32.gmra.mrb[0].mxu0 %v571
    %v655 = vpop.f32.mrb[0].mxu0
    %v656 = vadd.f32 0.0, %v655
    %v657 = vpop.f32.mrb[0].mxu0
    %658 = vdwg.mxu0
    %v659 = vmax.f32 %v656, 0.0
    %s660 = scalar_lea.vmem [#allocation7], 768
    %v661 = vld [vmem:[%s660] sm:$0xff]
    %v662 = vld [vmem:[%s660 + $0x8] sm:$0xff]
    %v663 = vld [vmem:[%s660 + $0x10] sm:$0xff]
    %v664 = vld [vmem:[%s660 + $0x18] sm:$0xff]
    %v665 = vld [vmem:[%s660 + $0x20] sm:$0xff]
    %v666 = vld [vmem:[%s660 + $0x28] sm:$0xff]
    %v667 = vld [vmem:[%s660 + $0x30] sm:$0xff]
    %v668 = vld [vmem:[%s660 + $0x38] sm:$0xff]
    %v669 = vld [vmem:[%s660 + $0x40] sm:$0xff]
    %v670 = vld [vmem:[%s660 + $0x48] sm:$0xff]
    %v671 = vld [vmem:[%s660 + $0x50] sm:$0xff]
    %v672 = vld [vmem:[%s660 + $0x58] sm:$0xff]
    %v673 = vld [vmem:[%s660 + $0x60] sm:$0xff]
    %v674 = vld [vmem:[%s660 + $0x68] sm:$0xff]
    %v675 = vld [vmem:[%s660 + $0x70] sm:$0xff]
    %v676 = vld [vmem:[%s660 + $0x78] sm:$0xff]
    %677 = vmatprep.subr.mxu0 0.0
    %678 = vmatpush1.msra.mxu0 %v661
    %679 = vmatprep.subr.mxu0 0.0
    %680 = vmatpush1.msra.mxu0 %v662
    %681 = vmatprep.subr.mxu0 0.0
    %682 = vmatpush1.msra.mxu0 %v663
    %683 = vmatprep.subr.mxu0 0.0
    %684 = vmatpush1.msra.mxu0 %v664
    %685 = vmatprep.subr.mxu0 0.0
    %686 = vmatpush1.msra.mxu0 %v665
    %687 = vmatprep.subr.mxu0 0.0
    %688 = vmatpush1.msra.mxu0 %v666
    %689 = vmatprep.subr.mxu0 0.0
    %690 = vmatpush1.msra.mxu0 %v667
    %691 = vmatprep.subr.mxu0 0.0
    %692 = vmatpush1.msra.mxu0 %v668
    %693 = vmatprep.subr.mxu0 0.0
    %694 = vmatpush1.msra.mxu0 %v669
    %695 = vmatprep.subr.mxu0 0.0
    %696 = vmatpush1.msra.mxu0 %v670
    %697 = vmatprep.subr.mxu0 0.0
    %698 = vmatpush1.msra.mxu0 %v671
    %699 = vmatprep.subr.mxu0 0.0
    %700 = vmatpush1.msra.mxu0 %v672
    %701 = vmatprep.subr.mxu0 0.0
    %702 = vmatpush1.msra.mxu0 %v673
    %703 = vmatprep.subr.mxu0 0.0
    %704 = vmatpush1.msra.mxu0 %v674
    %705 = vmatprep.subr.mxu0 0.0
    %706 = vmatpush1.msra.mxu0 %v675
    %707 = vmatprep.subr.mxu0 0.0
    %708 = vmatpush1.msra.mxu0 %v676
    %709 = vmatprep.subr.mxu0 0.0
    %710 = vmatpush1.msra.mxu0 0.0
    %711 = vmatprep.subr.mxu0 0.0
    %712 = vmatpush1.msra.mxu0 0.0
    %713 = vmatprep.subr.mxu0 0.0
    %714 = vmatpush1.msra.mxu0 0.0
    %715 = vmatprep.subr.mxu0 0.0
    %716 = vmatpush1.msra.mxu0 0.0
    %717 = vmatprep.subr.mxu0 0.0
    %718 = vmatpush1.msra.mxu0 0.0
    %719 = vmatprep.subr.mxu0 0.0
    %720 = vmatpush1.msra.mxu0 0.0
    %721 = vmatprep.subr.mxu0 0.0
    %722 = vmatpush1.msra.mxu0 0.0
    %723 = vmatprep.subr.mxu0 0.0
    %724 = vmatpush1.msra.mxu0 0.0
    %725 = vmatprep.subr.mxu0 0.0
    %726 = vmatpush1.msra.mxu0 0.0
    %727 = vmatprep.subr.mxu0 0.0
    %728 = vmatpush1.msra.mxu0 0.0
    %729 = vmatprep.subr.mxu0 0.0
    %730 = vmatpush1.msra.mxu0 0.0
    %731 = vmatprep.subr.mxu0 0.0
    %732 = vmatpush1.msra.mxu0 0.0
    %733 = vmatprep.subr.mxu0 0.0
    %734 = vmatpush1.msra.mxu0 0.0
    %735 = vmatprep.subr.mxu0 0.0
    %736 = vmatpush1.msra.mxu0 0.0
    %737 = vmatprep.subr.mxu0 0.0
    %738 = vmatpush1.msra.mxu0 0.0
    %739 = vmatprep.subr.mxu0 0.0
    %740 = vmatpush1.msra.mxu0 0.0
    %741 = vmatprep.mubr.f32.mxu0 0.0
    %742 = vmatmul.mubr.f32.gmra.mrb[0].mxu0 %v659
    %v743 = vpop.f32.mrb[0].mxu0
    %v744 = vadd.f32 0.0, %v743
    %v745 = vpop.f32.mrb[0].mxu0
    %746 = vdwg.mxu0
    %v747 = vmax.f32 %v744, 0.0
    %s748 = scalar_lea.vmem [#allocation7], 896
    %v749 = vld [vmem:[%s748] sm:$0xff]
    %v750 = vld [vmem:[%s748 + $0x8] sm:$0xff]
    %v751 = vld [vmem:[%s748 + $0x10] sm:$0xff]
    %v752 = vld [vmem:[%s748 + $0x18] sm:$0xff]
    %v753 = vld [vmem:[%s748 + $0x20] sm:$0xff]
    %v754 = vld [vmem:[%s748 + $0x28] sm:$0xff]
    %v755 = vld [vmem:[%s748 + $0x30] sm:$0xff]
    %v756 = vld [vmem:[%s748 + $0x38] sm:$0xff]
    %v757 = vld [vmem:[%s748 + $0x40] sm:$0xff]
    %v758 = vld [vmem:[%s748 + $0x48] sm:$0xff]
    %v759 = vld [vmem:[%s748 + $0x50] sm:$0xff]
    %v760 = vld [vmem:[%s748 + $0x58] sm:$0xff]
    %v761 = vld [vmem:[%s748 + $0x60] sm:$0xff]
    %v762 = vld [vmem:[%s748 + $0x68] sm:$0xff]
    %v763 = vld [vmem:[%s748 + $0x70] sm:$0xff]
    %v764 = vld [vmem:[%s748 + $0x78] sm:$0xff]
    %765 = vmatprep.subr.mxu0 0.0
    %766 = vmatpush1.msra.mxu0 %v749
    %767 = vmatprep.subr.mxu0 0.0
    %768 = vmatpush1.msra.mxu0 %v750
    %769 = vmatprep.subr.mxu0 0.0
    %770 = vmatpush1.msra.mxu0 %v751
    %771 = vmatprep.subr.mxu0 0.0
    %772 = vmatpush1.msra.mxu0 %v752
    %773 = vmatprep.subr.mxu0 0.0
    %774 = vmatpush1.msra.mxu0 %v753
    %775 = vmatprep.subr.mxu0 0.0
    %776 = vmatpush1.msra.mxu0 %v754
    %777 = vmatprep.subr.mxu0 0.0
    %778 = vmatpush1.msra.mxu0 %v755
    %779 = vmatprep.subr.mxu0 0.0
    %780 = vmatpush1.msra.mxu0 %v756
    %781 = vmatprep.subr.mxu0 0.0
    %782 = vmatpush1.msra.mxu0 %v757
    %783 = vmatprep.subr.mxu0 0.0
    %784 = vmatpush1.msra.mxu0 %v758
    %785 = vmatprep.subr.mxu0 0.0
    %786 = vmatpush1.msra.mxu0 %v759
    %787 = vmatprep.subr.mxu0 0.0
    %788 = vmatpush1.msra.mxu0 %v760
    %789 = vmatprep.subr.mxu0 0.0
    %790 = vmatpush1.msra.mxu0 %v761
    %791 = vmatprep.subr.mxu0 0.0
    %792 = vmatpush1.msra.mxu0 %v762
    %793 = vmatprep.subr.mxu0 0.0
    %794 = vmatpush1.msra.mxu0 %v763
    %795 = vmatprep.subr.mxu0 0.0
    %796 = vmatpush1.msra.mxu0 %v764
    %797 = vmatprep.subr.mxu0 0.0
    %798 = vmatpush1.msra.mxu0 0.0
    %799 = vmatprep.subr.mxu0 0.0
    %800 = vmatpush1.msra.mxu0 0.0
    %801 = vmatprep.subr.mxu0 0.0
    %802 = vmatpush1.msra.mxu0 0.0
    %803 = vmatprep.subr.mxu0 0.0
    %804 = vmatpush1.msra.mxu0 0.0
    %805 = vmatprep.subr.mxu0 0.0
    %806 = vmatpush1.msra.mxu0 0.0
    %807 = vmatprep.subr.mxu0 0.0
    %808 = vmatpush1.msra.mxu0 0.0
    %809 = vmatprep.subr.mxu0 0.0
    %810 = vmatpush1.msra.mxu0 0.0
    %811 = vmatprep.subr.mxu0 0.0
    %812 = vmatpush1.msra.mxu0 0.0
    %813 = vmatprep.subr.mxu0 0.0
    %814 = vmatpush1.msra.mxu0 0.0
    %815 = vmatprep.subr.mxu0 0.0
    %816 = vmatpush1.msra.mxu0 0.0
    %817 = vmatprep.subr.mxu0 0.0
    %818 = vmatpush1.msra.mxu0 0.0
    %819 = vmatprep.subr.mxu0 0.0
    %820 = vmatpush1.msra.mxu0 0.0
    %821 = vmatprep.subr.mxu0 0.0
    %822 = vmatpush1.msra.mxu0 0.0
    %823 = vmatprep.subr.mxu0 0.0
    %824 = vmatpush1.msra.mxu0 0.0
    %825 = vmatprep.subr.mxu0 0.0
    %826 = vmatpush1.msra.mxu0 0.0
    %827 = vmatprep.subr.mxu0 0.0
    %828 = vmatpush1.msra.mxu0 0.0
    %829 = vmatprep.mubr.f32.mxu0 0.0
    %830 = vmatmul.mubr.f32.gmra.mrb[0].mxu0 %v747
    %v831 = vpop.f32.mrb[0].mxu0
    %v832 = vadd.f32 0.0, %v831
    %v833 = vpop.f32.mrb[0].mxu0
    %834 = vdwg.mxu0
    %v835 = vmax.f32 %v832, 0.0
    %s836 = scalar_lea.vmem [#allocation7], 1024
    %v837 = vld [vmem:[%s836] sm:$0xff]
    %v838 = vld [vmem:[%s836 + $0x8] sm:$0xff]
    %v839 = vld [vmem:[%s836 + $0x10] sm:$0xff]
    %v840 = vld [vmem:[%s836 + $0x18] sm:$0xff]
    %v841 = vld [vmem:[%s836 + $0x20] sm:$0xff]
    %v842 = vld [vmem:[%s836 + $0x28] sm:$0xff]
    %v843 = vld [vmem:[%s836 + $0x30] sm:$0xff]
    %v844 = vld [vmem:[%s836 + $0x38] sm:$0xff]
    %v845 = vld [vmem:[%s836 + $0x40] sm:$0xff]
    %v846 = vld [vmem:[%s836 + $0x48] sm:$0xff]
    %v847 = vld [vmem:[%s836 + $0x50] sm:$0xff]
    %v848 = vld [vmem:[%s836 + $0x58] sm:$0xff]
    %v849 = vld [vmem:[%s836 + $0x60] sm:$0xff]
    %v850 = vld [vmem:[%s836 + $0x68] sm:$0xff]
    %v851 = vld [vmem:[%s836 + $0x70] sm:$0xff]
    %v852 = vld [vmem:[%s836 + $0x78] sm:$0xff]
    %853 = vmatprep.subr.mxu0 0.0
    %854 = vmatpush1.msra.mxu0 %v837
    %855 = vmatprep.subr.mxu0 0.0
    %856 = vmatpush1.msra.mxu0 %v838
    %857 = vmatprep.subr.mxu0 0.0
    %858 = vmatpush1.msra.mxu0 %v839
    %859 = vmatprep.subr.mxu0 0.0
    %860 = vmatpush1.msra.mxu0 %v840
    %861 = vmatprep.subr.mxu0 0.0
    %862 = vmatpush1.msra.mxu0 %v841
    %863 = vmatprep.subr.mxu0 0.0
    %864 = vmatpush1.msra.mxu0 %v842
    %865 = vmatprep.subr.mxu0 0.0
    %866 = vmatpush1.msra.mxu0 %v843
    %867 = vmatprep.subr.mxu0 0.0
    %868 = vmatpush1.msra.mxu0 %v844
    %869 = vmatprep.subr.mxu0 0.0
    %870 = vmatpush1.msra.mxu0 %v845
    %871 = vmatprep.subr.mxu0 0.0
    %872 = vmatpush1.msra.mxu0 %v846
    %873 = vmatprep.subr.mxu0 0.0
    %874 = vmatpush1.msra.mxu0 %v847
    %875 = vmatprep.subr.mxu0 0.0
    %876 = vmatpush1.msra.mxu0 %v848
    %877 = vmatprep.subr.mxu0 0.0
    %878 = vmatpush1.msra.mxu0 %v849
    %879 = vmatprep.subr.mxu0 0.0
    %880 = vmatpush1.msra.mxu0 %v850
    %881 = vmatprep.subr.mxu0 0.0
    %882 = vmatpush1.msra.mxu0 %v851
    %883 = vmatprep.subr.mxu0 0.0
    %884 = vmatpush1.msra.mxu0 %v852
    %885 = vmatprep.subr.mxu0 0.0
    %886 = vmatpush1.msra.mxu0 0.0
    %887 = vmatprep.subr.mxu0 0.0
    %888 = vmatpush1.msra.mxu0 0.0
    %889 = vmatprep.subr.mxu0 0.0
    %890 = vmatpush1.msra.mxu0 0.0
    %891 = vmatprep.subr.mxu0 0.0
    %892 = vmatpush1.msra.mxu0 0.0
    %893 = vmatprep.subr.mxu0 0.0
    %894 = vmatpush1.msra.mxu0 0.0
    %895 = vmatprep.subr.mxu0 0.0
    %896 = vmatpush1.msra.mxu0 0.0
    %897 = vmatprep.subr.mxu0 0.0
    %898 = vmatpush1.msra.mxu0 0.0
    %899 = vmatprep.subr.mxu0 0.0
    %900 = vmatpush1.msra.mxu0 0.0
    %901 = vmatprep.subr.mxu0 0.0
    %902 = vmatpush1.msra.mxu0 0.0
    %903 = vmatprep.subr.mxu0 0.0
    %904 = vmatpush1.msra.mxu0 0.0
    %905 = vmatprep.subr.mxu0 0.0
    %906 = vmatpush1.msra.mxu0 0.0
    %907 = vmatprep.subr.mxu0 0.0
    %908 = vmatpush1.msra.mxu0 0.0
    %909 = vmatprep.subr.mxu0 0.0
    %910 = vmatpush1.msra.mxu0 0.0
    %911 = vmatprep.subr.mxu0 0.0
    %912 = vmatpush1.msra.mxu0 0.0
    %913 = vmatprep.subr.mxu0 0.0
    %914 = vmatpush1.msra.mxu0 0.0
    %915 = vmatprep.subr.mxu0 0.0
    %916 = vmatpush1.msra.mxu0 0.0
    %917 = vmatprep.mubr.f32.mxu0 0.0
    %918 = vmatmul.mubr.f32.gmra.mrb[0].mxu0 %v835
    %v919 = vpop.f32.mrb[0].mxu0
    %v920 = vadd.f32 0.0, %v919
    %v921 = vpop.f32.mrb[0].mxu0
    %922 = vdwg.mxu0
    %923 = vst [vmem:[#allocation8] sm:$0xff] %v920
    // Predicated region
    $region26: #{tpu_custom_call.1} parent=1 // pred_check
      _
    $region27: #{tpu_custom_call.1} parent=1 // pred_check_branch
      %925 = sbr.rel (0) target = $region29
    $region28: #{tpu_custom_call.1} parent=1 // pred_region
      %s927 = ssub.s32 128, 128
      %928 = vsyncadd [#allocation4], %s927
      %s930 = sshll.u32 [#allocation8], 4
      %s931 = int_to_ptr.vmem [resolvable:$true] %s930
      %933 = dma.vmem_to_hbm [thread:$0]  %s931, 128, %s3, [#allocation4]
    $region29: #{tpu_custom_call.1} parent=1 // pred_fallthru
      _
    // Predicated region
    $region30: #{tpu_custom_call.1} parent=1 // pred_check
      _
    $region31: #{tpu_custom_call.1} parent=1 // pred_check_branch
      %935 = sbr.rel (0) target = $region33
    $region32: #{tpu_custom_call.1} parent=1 // pred_region
      %936 = dma.done [#allocation4], 128
    $region33: #{tpu_custom_call.1} parent=1 // pred_fallthru
      _
    %937 = vsyncpa [#allocation3], 1
    %938 = vsyncpa [#allocation6], 1
    %939 = vsyncpa [#allocation4], 1

</llo_original>
